<compile_context>
chip_gen: v7x
topology: tpu7x:2x2x1
jax: 0.10.0
libtpu: 0.0.40
codegen_flags: <defaults>
</compile_context>

<pallas_src>
import functools

import jax
import jax.numpy as jnp
from jax.experimental import pallas as pl
from jax.experimental.pallas import tpu as pltpu


# ----------------------------- Pallas kernel -----------------------------
def _linear_kernel(x_ref, wt_ref, b_ref, o_ref):
    """One (tm, tn) f32 output tile, accumulated in place over the K grid axis."""
    k = pl.program_id(2)

    @pl.when(k == 0)
    def _init():
        # Seed the resident output tile with the bias row (broadcast over tm).
        o_ref[...] = jnp.broadcast_to(b_ref[...], o_ref.shape)

    # bf16 x bf16 -> f32 accumulate, single MXU pass.
    o_ref[...] += jnp.dot(
        x_ref[...], wt_ref[...], preferred_element_type=jnp.float32
    )


def _round_up(x, m):
    return (x + m - 1) // m * m


def _choose_nk_tiles(K, N):
    """Pick lane-dense (tk, tn) and padded (Kp, Np) from the static weight shape."""
    Kp = _round_up(K, 128)
    Np = _round_up(N, 128)

    # K: one reduction step when it fits comfortably in VMEM, else 512-wide steps.
    if Kp <= 1024:
        tk = Kp
    else:
        tk = 512
        Kp = _round_up(Kp, tk)

    # N: lane-dense tiles capped at 512; prefer >=2 blocks along N when N is
    # large enough so a "parallel" grid axis exists for v7x's second TensorCore.
    if Np <= 256:
        tn = Np
    else:
        tn = min(512, _round_up(Np // 2, 128))
        Np = _round_up(Np, tn)

    return tk, tn, Kp, Np


def linear_pallas(x, wt_p, b_p, *, n_out, tk, tn, tm_cap=512):
    """y = x @ W^T + b.

    wt_p : [Kp, Np] bfloat16, pre-transposed and pre-padded at module init.
    b_p  : [1,  Np] float32, pre-padded at module init.
    """
    M, K = x.shape
    Kp, Np = wt_p.shape

    tm = min(_round_up(M, 8), tm_cap)
    Mp = _round_up(M, tm)

    xb = x.astype(jnp.bfloat16)
    if (Mp, Kp) != (M, K):
        xb = jnp.pad(xb, ((0, Mp - M), (0, Kp - K)))

    grid = (Mp // tm, Np // tn, Kp // tk)

    out = pl.pallas_call(
        _linear_kernel,
        out_shape=jax.ShapeDtypeStruct((Mp, Np), jnp.float32),
        grid_spec=pltpu.PrefetchScalarGridSpec(
            num_scalar_prefetch=0,
            grid=grid,
            in_specs=[
                pl.BlockSpec((tm, tk), lambda i, j, k: (i, k)),   # x tile (bf16)
                pl.BlockSpec((tk, tn), lambda i, j, k: (k, j)),   # W^T tile (bf16)
                pl.BlockSpec((1, tn), lambda i, j, k: (0, j)),    # bias row (f32)
            ],
            out_specs=pl.BlockSpec((tm, tn), lambda i, j, k: (i, j)),
        ),
        compiler_params=pltpu.CompilerParams(
            dimension_semantics=("parallel", "parallel", "arbitrary"),
            vmem_limit_bytes=48 * 1024 * 1024,
        ),
    )(xb, wt_p, b_p)

    return out[:M, :n_out]


# ----------------------------- Module wrappers ----------------------------
class LinearModule:
    """Deterministic stand-in for the wrapped nn.Linear(in_f, out_f)."""

    def __init__(self, in_features, out_features, key):
        k_w, k_b = jax.random.split(key)
        bound = 1.0 / (in_features ** 0.5)
        # PyTorch Linear init: U(-1/sqrt(in), 1/sqrt(in)).
        weight = jax.random.uniform(
            k_w, (out_features, in_features), jnp.float32, -bound, bound
        )
        bias = jax.random.uniform(
            k_b, (out_features,), jnp.float32, -bound, bound
        )

        # f32 copies kept only for the numerical reference check.
        self.weight_t_f32 = jnp.asarray(weight.T)          # [in, out]
        self.bias = bias

        # Static tile choice + one-time transpose / pad / bf16 cast of params.
        tk, tn, Kp, Np = _choose_nk_tiles(in_features, out_features)
        self._tk, self._tn = tk, tn
        self.weight_t = jnp.pad(
            self.weight_t_f32, ((0, Kp - in_features), (0, Np - out_features))
        ).astype(jnp.bfloat16)                               # [Kp, Np] bf16
        self.bias_p = jnp.pad(
            bias.reshape(1, out_features), ((0, 0), (0, Np - out_features))
        )                                                    # [1, Np] f32

        # jit the whole forward (cast + optional x pad + pallas_call + slice).
        self._fwd = jax.jit(
            functools.partial(linear_pallas, n_out=out_features, tk=tk, tn=tn)
        )

    def __call__(self, x):
        return self._fwd(x, self.weight_t, self.bias_p)


class WrappedModel:
    """forward(x) = self.module(x) — pure delegation, no compute of its own."""

    def __init__(self, module):
        self.module = module

    def __call__(self, x):
        return self.module(x)


# --------------------------------- Main -----------------------------------
if __name__ == "__main__":
    key = jax.random.PRNGKey(0)
    k_x, k_m = jax.random.split(key)

    # Tile-friendly demo shapes: grid = (1, 2, 1) with (256, 256, 512) tiles,
    # so the N "parallel" axis has 2 blocks (both v7x TensorCores get work).
    BATCH, IN_F, OUT_F = 256, 512, 512
    x = jax.random.normal(k_x, (BATCH, IN_F), jnp.float32)

    model = WrappedModel(LinearModule(IN_F, OUT_F, k_m))

    y = model(x)
    y = jax.block_until_ready(y)

    # Sanity check against a high-precision plain-JAX reference (f32 params).
    ref = (
        jnp.dot(x, model.module.weight_t_f32, precision=jax.lax.Precision.HIGHEST)
        + model.module.bias
    )
    assert y.shape == (BATCH, OUT_F)
    assert y.dtype == jnp.float32
    assert jnp.allclose(y, ref, atol=3e-2, rtol=3e-2)

    print("KERNEL_OK")
</pallas_src>

<mosaic_0001>
module attributes {stable_mosaic.version = 11 : i64} {
  func.func @_linear_kernel(%arg0: i32, %arg1: i32, %arg2: i32, %arg3: memref<256x512xbf16, #tpu.memory_space<vmem>>, %arg4: memref<512x256xbf16, #tpu.memory_space<vmem>>, %arg5: memref<1x256xf32, #tpu.memory_space<vmem>>, %arg6: memref<256x256xf32, #tpu.memory_space<vmem>>) attributes {dimension_semantics = [#tpu.dimension_semantics<parallel>, #tpu.dimension_semantics<parallel>, #tpu.dimension_semantics<arbitrary>], iteration_bounds = array<i64: 1, 2, 1>, scalar_prefetch = 0 : i64, scratch_operands = 0 : i64, tpu.core_type = #tpu.core_type<tc>, window_params = [{transform_indices = @transform_0, window_bounds = array<i64: 256, 512>}, {transform_indices = @transform_1, window_bounds = array<i64: 512, 256>}, {transform_indices = @transform_2, window_bounds = array<i64: 1, 256>}, {transform_indices = @transform_3, window_bounds = array<i64: 256, 256>}]} {
    %c0_i32 = arith.constant 0 : i32
    %0 = arith.cmpi eq, %arg2, %c0_i32 : i32
    %1 = arith.extui %0 : i1 to i32
    %c0_i32_0 = arith.constant 0 : i32
    %2 = arith.cmpi ne, %1, %c0_i32_0 : i32
    scf.if %2 {
      %c0_8 = arith.constant 0 : index
      %c0_9 = arith.constant 0 : index
      %9 = vector.load %arg5[%c0_8, %c0_9] : memref<1x256xf32, #tpu.memory_space<vmem>>, vector<1x256xf32>
      %10 = vector.shape_cast %9 : vector<1x256xf32> to vector<1x256xf32>
      %11 = vector.broadcast %10 : vector<1x256xf32> to vector<256x256xf32>
      %c0_10 = arith.constant 0 : index
      %c0_11 = arith.constant 0 : index
      %12 = vector.load %arg6[%c0_10, %c0_11] : memref<256x256xf32, #tpu.memory_space<vmem>>, vector<256x256xf32>
      tpu.vector_store %arg6[%c0_10, %c0_11], %11 {strides = array<i32>} : memref<256x256xf32, #tpu.memory_space<vmem>>, vector<256x256xf32>,
    } else {
    }
    %c0 = arith.constant 0 : index
    %c0_1 = arith.constant 0 : index
    %3 = vector.load %arg6[%c0, %c0_1] : memref<256x256xf32, #tpu.memory_space<vmem>>, vector<256x256xf32>
    %c0_2 = arith.constant 0 : index
    %c0_3 = arith.constant 0 : index
    %4 = vector.load %arg3[%c0_2, %c0_3] : memref<256x512xbf16, #tpu.memory_space<vmem>>, vector<256x512xbf16>
    %c0_4 = arith.constant 0 : index
    %c0_5 = arith.constant 0 : index
    %5 = vector.load %arg4[%c0_4, %c0_5] : memref<512x256xbf16, #tpu.memory_space<vmem>>, vector<512x256xbf16>
    %cst = arith.constant dense<0.000000e+00> : vector<256x256xf32>
    %6 = tpu.matmul %4, %5, %cst {dimension_numbers = #tpu.dot_dimension_numbers<[1], [0], [0], [1], [0, 0, 1, 1], [], []>} : vector<256x512xbf16>, vector<512x256xbf16>, vector<256x256xf32> -> vector<256x256xf32>
    %7 = arith.addf %3, %6 : vector<256x256xf32>
    %c0_6 = arith.constant 0 : index
    %c0_7 = arith.constant 0 : index
    %8 = vector.load %arg6[%c0_6, %c0_7] : memref<256x256xf32, #tpu.memory_space<vmem>>, vector<256x256xf32>
    tpu.vector_store %arg6[%c0_6, %c0_7], %7 {strides = array<i32>} : memref<256x256xf32, #tpu.memory_space<vmem>>, vector<256x256xf32>,
    return
  }
  func.func @transform_0(%arg0: i32, %arg1: i32, %arg2: i32) -> (i32, i32) {
    %c0_i32 = arith.constant 0 : i32
    return %arg0, %arg2 : i32, i32
  }
  func.func @transform_1(%arg0: i32, %arg1: i32, %arg2: i32) -> (i32, i32) {
    %c0_i32 = arith.constant 0 : i32
    return %arg2, %arg1 : i32, i32
  }
  func.func @transform_2(%arg0: i32, %arg1: i32, %arg2: i32) -> (i32, i32) {
    %c0_i32 = arith.constant 0 : i32
    %c0_i32_0 = arith.constant 0 : i32
    return %c0_i32, %arg1 : i32, i32
  }
  func.func @transform_3(%arg0: i32, %arg1: i32, %arg2: i32) -> (i32, i32) {
    %c0_i32 = arith.constant 0 : i32
    return %arg0, %arg1 : i32, i32
  }
}

</mosaic_0001>

<llo_original>
// kernel: linear_pallas.1
$region0: #{linear_pallas.1}
  #allocation0 [shape = 'u32[]', space=smem, size = 0x4, offset = 0x4, fixed_abs, tag = 'smem constant byte address 0x4 - core index']
  #allocation1 [shape = 'u32[144,128]{1,0:T(1,128)}', space=vmem, size = 0x12000, scoped, tag = 'internal scratch']
  %s0 = inlined_call_operand.vmem [shape: bf16[256,512], index: 0, kind: input, shape index: {}]
  %s1 = inlined_call_operand.vmem [shape: bf16[512,512], index: 1, kind: input, shape index: {}]
  %s2 = inlined_call_operand.vmem [shape: f32[1,512], index: 2, kind: input, shape index: {}]
  %s3 = inlined_call_operand.hbm [shape: f32[256,512], index: 3, kind: output, shape index: {}]
  %s4 = sld [smem:[#allocation0]]
  $region87: #{linear_pallas.1} parent=0
    _
  %s6 = ssub.s32 1, %s4
  %s7 = scalar_select 0, %s6, %s4
  $region1: #{linear_pallas.1} parent=0
    #allocation2 [shape = 'u8[524288]{0}', space=vmem, size = 0x80000, scoped, tag = 'input window, operand 1']
    #allocation3 [shape = 'u8[524288]{0}', space=vmem, size = 0x80000, scoped, tag = 'output window, operand 0']
    #allocation4 [shape = 's32[2]{0}', space=sflag, size = 0x8, scoped, tag = 'scoped memory for linear_pallas.1']
    %8 = vsyncpa [#allocation4], 0
    %s9 = scalar_lea.sflag [#allocation4], 1
    %10 = vsyncpa %s9, 0
    loop: start=0, step=1, limit=4
    $region2: #{linear_pallas.1} parent=1 // loop_pre_header
      _
    $region3: #{linear_pallas.1} parent=1 // loop_header
      %s12 = sphi 0, %s16
      %p13 = scmp.ge.s32.totalorder %s12, 4
      %s19 = sphi 0, %s38
      %s20 = sphi 0, %s34
      %s21 = sphi 0, %s30
      %s22 = sphi 0, %s19
      %s23 = sphi 0, %s20
      %s24 = sphi 0, %s21
      %s25 = sphi 0, %s22
      %s26 = sphi 0, %s23
      %s27 = sphi 0, %s24
      %s43 = sphi 0, %s45
      %s46 = sphi 0, %s43
      %s47 = sphi 0, %s46
      %s63 = sphi 0, %s47
      %s71 = sphi 0, %s73
      %s74 = sphi 0, %s71
      %s75 = sphi 0, %s74
      %s91 = sphi 0, %s75
      %s97 = sphi 0, %s99
      %s100 = sphi 0, %s97
      %s101 = sphi 0, %s100
      %s117 = sphi 0, %s101
      %s125 = sphi 0, %s127
      %s128 = sphi 0, %s125
      %s129 = sphi 0, %s128
      %s145 = sphi 0, %s129
    $region4: #{linear_pallas.1} parent=1 // loop_header_branch
      %15 = sbr.rel (%p13) target = $region8
    $region5: #{linear_pallas.1} parent=1 // loop_body
      %s17 = ssub.s32 %s12, 1
      %s18 = ssub.s32 %s12, 2
      %s28 = sadd.s32 1, %s21
      %p29 = scmp.ge.s32.totalorder %s28, 1
      %s30 = scalar_select %p29, 0, %s28
      %s31 = sadd.s32 1, %s20
      %s32 = scalar_select %p29, %s31, %s20
      %p33 = scmp.ge.s32.totalorder %s32, 2
      %s34 = scalar_select %p33, 0, %s32
      %s35 = sadd.s32 1, %s19
      %s36 = scalar_select %p33, %s35, %s19
      %p37 = scmp.ge.s32.totalorder %s36, 1
      %s38 = scalar_select %p37, 0, %s36
      %s39 = ssub.s32 %s19, %s38
      %s40 = ssub.s32 %s21, %s30
      %s41 = sor.u32 %s39, %s40
      %p42 = scmp.eq.s32.totalorder %s41, 0
      %s44 = sadd.s32 %s43, 1
      %s45 = scalar_select %p42, %s43, %s44
      %p48 = pneg %p42
      %p49 = scmp.eq.s32.totalorder %s12, 1
      %p50 = por %p48, %p49
      %p51 = scmp.ne.s32.totalorder %s43, %s46
      %p52 = scmp.eq.s32.totalorder %s12, 0
      %p53 = por %p51, %p52
      %p54 = scmp.ne.s32.totalorder %s43, %s46
      %p55 = scmp.eq.s32.totalorder %s17, 1
      %p56 = por %p54, %p55
      %p57 = scmp.ne.s32.totalorder %s46, %s47
      %p58 = scmp.eq.s32.totalorder %s17, 0
      %p59 = por %p57, %p58
      %p60 = scmp.ne.s32.totalorder %s46, %s47
      %p61 = scmp.eq.s32.totalorder %s18, 1
      %p62 = por %p60, %p61
      %p64 = scmp.ne.s32.totalorder %s47, %s63
      %p65 = scmp.eq.s32.totalorder %s18, 0
      %p66 = por %p64, %p65
      %s67 = ssub.s32 %s21, %s30
      %s68 = ssub.s32 %s20, %s34
      %s69 = sor.u32 %s67, %s68
      %p70 = scmp.eq.s32.totalorder %s69, 0
      %s72 = sadd.s32 %s71, 1
      %s73 = scalar_select %p70, %s71, %s72
      %p76 = pneg %p70
      %p77 = scmp.eq.s32.totalorder %s12, 1
      %p78 = por %p76, %p77
      %p79 = scmp.ne.s32.totalorder %s71, %s74
      %p80 = scmp.eq.s32.totalorder %s12, 0
      %p81 = por %p79, %p80
      %p82 = scmp.ne.s32.totalorder %s71, %s74
      %p83 = scmp.eq.s32.totalorder %s17, 1
      %p84 = por %p82, %p83
      %p85 = scmp.ne.s32.totalorder %s74, %s75
      %p86 = scmp.eq.s32.totalorder %s17, 0
      %p87 = por %p85, %p86
      %p88 = scmp.ne.s32.totalorder %s74, %s75
      %p89 = scmp.eq.s32.totalorder %s18, 1
      %p90 = por %p88, %p89
      %p92 = scmp.ne.s32.totalorder %s75, %s91
      %p93 = scmp.eq.s32.totalorder %s18, 0
      %p94 = por %p92, %p93
      %s95 = ssub.s32 %s20, %s34
      %p96 = scmp.eq.s32.totalorder %s95, 0
      %s98 = sadd.s32 %s97, 1
      %s99 = scalar_select %p96, %s97, %s98
      %p102 = pneg %p96
      %p103 = scmp.eq.s32.totalorder %s12, 1
      %p104 = por %p102, %p103
      %p105 = scmp.ne.s32.totalorder %s97, %s100
      %p106 = scmp.eq.s32.totalorder %s12, 0
      %p107 = por %p105, %p106
      %p108 = scmp.ne.s32.totalorder %s97, %s100
      %p109 = scmp.eq.s32.totalorder %s17, 1
      %p110 = por %p108, %p109
      %p111 = scmp.ne.s32.totalorder %s100, %s101
      %p112 = scmp.eq.s32.totalorder %s17, 0
      %p113 = por %p111, %p112
      %p114 = scmp.ne.s32.totalorder %s100, %s101
      %p115 = scmp.eq.s32.totalorder %s18, 1
      %p116 = por %p114, %p115
      %p118 = scmp.ne.s32.totalorder %s101, %s117
      %p119 = scmp.eq.s32.totalorder %s18, 0
      %p120 = por %p118, %p119
      %s121 = ssub.s32 %s19, %s38
      %s122 = ssub.s32 %s20, %s34
      %s123 = sor.u32 %s121, %s122
      %p124 = scmp.eq.s32.totalorder %s123, 0
      %s126 = sadd.s32 %s125, 1
      %s127 = scalar_select %p124, %s125, %s126
      %p130 = pneg %p124
      %p131 = scmp.eq.s32.totalorder %s12, 1
      %p132 = por %p130, %p131
      %p133 = scmp.ne.s32.totalorder %s125, %s128
      %p134 = scmp.eq.s32.totalorder %s12, 0
      %p135 = por %p133, %p134
      %p136 = scmp.ne.s32.totalorder %s125, %s128
      %p137 = scmp.eq.s32.totalorder %s17, 1
      %p138 = por %p136, %p137
      %p139 = scmp.ne.s32.totalorder %s128, %s129
      %p140 = scmp.eq.s32.totalorder %s17, 0
      %p141 = por %p139, %p140
      %p142 = scmp.ne.s32.totalorder %s128, %s129
      %p143 = scmp.eq.s32.totalorder %s18, 1
      %p144 = por %p142, %p143
      %p146 = scmp.ne.s32.totalorder %s129, %s145
      %p147 = scmp.eq.s32.totalorder %s18, 0
      %p148 = por %p146, %p147
      %p149 = scmp.le.s32.totalorder 1, %s12
      %p150 = scmp.lt.s32.totalorder %s12, 3
      %p151 = pnand %p149, %p150
      %p152 = pneg %p151
      // Predicated region
      $region9: #{linear_pallas.1} parent=5 // pred_check
        _
      $region10: #{linear_pallas.1} parent=5 // pred_check_branch
        %154 = sbr.rel (%p151) target = $region12
      $region11: #{linear_pallas.1} parent=5 // pred_region
        %s155 = ssub.s32 %s12, 1
        // Predicated region
        $region13: #{linear_pallas.1} parent=11 // pred_check
          %p156 = pneg %p59
        $region14: #{linear_pallas.1} parent=11 // pred_check_branch
          %158 = sbr.rel (%p156) target = $region16
        $region15: #{linear_pallas.1} parent=11 // pred_region
          %s159 = smul.u32 32, %s22
          %s160 = smul.u32 4, %s24
          %p161 = scmp.lt.s32.totalorder %s159, 31
          %s162 = scalar_select %p161, %s159, 31
          %p163 = scmp.lt.s32.totalorder %s160, 3
          %s164 = scalar_select %p163, %s160, 3
          %s165 = smul.addr %s162, 4
          %s166 = sadd.s32 %s164, %s165
          %s167 = smul.addr %s166, 4
          %s168 = scalar_lea.vmem %s0, %s167
          %s169 = smul.u32 32, %s22
          %s170 = smul.u32 4, %s24
        $region16: #{linear_pallas.1} parent=11 // pred_fallthru
          _
      $region12: #{linear_pallas.1} parent=5 // pred_fallthru
        _
      %p171 = scmp.lt.s32.totalorder %s12, 2
      // Predicated region
      $region17: #{linear_pallas.1} parent=5 // pred_check
        %p172 = pneg %p171
      $region18: #{linear_pallas.1} parent=5 // pred_check_branch
        %174 = sbr.rel (%p172) target = $region20
      $region19: #{linear_pallas.1} parent=5 // pred_region
        // Predicated region
        $region21: #{linear_pallas.1} parent=19 // pred_check
          %p175 = pneg %p81
        $region22: #{linear_pallas.1} parent=19 // pred_check_branch
          %177 = sbr.rel (%p175) target = $region24
        $region23: #{linear_pallas.1} parent=19 // pred_region
          %s178 = sand.u32 %s71, 1
          %s179 = sand.u32 %s71, 1
          %s180 = smul.addr %s179, 512
          %s181 = scalar_lea.vmem [#allocation2], %s180
          %s182 = smul.u32 64, %s21
          %s183 = smul.u32 2, %s20
          %s184 = smul.addr %s182, 4
          %s185 = sadd.s32 %s183, %s184
          %s186 = smul.addr %s185, 4
          %s187 = scalar_lea.vmem %s1, %s186
          // Predicated region
          $region25: #{linear_pallas.1} parent=23 // pred_check
            _
          $region26: #{linear_pallas.1} parent=23 // pred_check_branch
            %189 = sbr.rel (0) target = $region28
          $region27: #{linear_pallas.1} parent=23 // pred_region
            // Predicated region
            $region29: #{linear_pallas.1} parent=27 // pred_check
              _
            $region30: #{linear_pallas.1} parent=27 // pred_check_branch
              %191 = sbr.rel (0) target = $region32
            $region31: #{linear_pallas.1} parent=27 // pred_region
              // Predicated region
              $region44: #{linear_pallas.1} parent=31 // pred_check
                _
              $region45: #{linear_pallas.1} parent=31 // pred_check_branch
                %332 = sbr.rel (0) target = $region47
              $region46: #{linear_pallas.1} parent=31 // pred_region
                loop: start=0, step=1, limit=1
                $region48: #{linear_pallas.1} parent=46 // loop_pre_header
                  _
                $region49: #{linear_pallas.1} parent=46 // loop_header
                  %s334 = sphi 0, %s338
                  %p335 = scmp.ge.s32.totalorder %s334, 1
                  %s339 = sphi %s187, %s187
                  %s340 = sphi %s181, %s181
                $region50: #{linear_pallas.1} parent=46 // loop_header_branch
                  %337 = sbr.rel (%p335) target = $region54
                $region51: #{linear_pallas.1} parent=46 // loop_body
                  %v341 = vld [vmem:[%s339] sm:$0xff]
                  %342 = vst [vmem:[%s340] sm:$0xff] %v341
                  %v343 = vld [vmem:[%s339 + $0x10] sm:$0xff]
                  %344 = vst [vmem:[%s340 + $0x8] sm:$0xff] %v343
                  %v345 = vld [vmem:[%s339 + $0x20] sm:$0xff]
                  %346 = vst [vmem:[%s340 + $0x10] sm:$0xff] %v345
                  %v347 = vld [vmem:[%s339 + $0x30] sm:$0xff]
                  %348 = vst [vmem:[%s340 + $0x18] sm:$0xff] %v347
                  %v349 = vld [vmem:[%s339 + $0x40] sm:$0xff]
                  %350 = vst [vmem:[%s340 + $0x20] sm:$0xff] %v349
                  %v351 = vld [vmem:[%s339 + $0x50] sm:$0xff]
                  %352 = vst [vmem:[%s340 + $0x28] sm:$0xff] %v351
                  %v353 = vld [vmem:[%s339 + $0x60] sm:$0xff]
                  %354 = vst [vmem:[%s340 + $0x30] sm:$0xff] %v353
                  %v355 = vld [vmem:[%s339 + $0x70] sm:$0xff]
                  %356 = vst [vmem:[%s340 + $0x38] sm:$0xff] %v355
                  %v357 = vld [vmem:[%s339 + $0x80] sm:$0xff]
                  %358 = vst [vmem:[%s340 + $0x40] sm:$0xff] %v357
                  %v359 = vld [vmem:[%s339 + $0x90] sm:$0xff]
                  %360 = vst [vmem:[%s340 + $0x48] sm:$0xff] %v359
                  %v361 = vld [vmem:[%s339 + $0xa0] sm:$0xff]
                  %362 = vst [vmem:[%s340 + $0x50] sm:$0xff] %v361
                  %v363 = vld [vmem:[%s339 + $0xb0] sm:$0xff]
                  %364 = vst [vmem:[%s340 + $0x58] sm:$0xff] %v363
                  %v365 = vld [vmem:[%s339 + $0xc0] sm:$0xff]
                  %366 = vst [vmem:[%s340 + $0x60] sm:$0xff] %v365
                  %v367 = vld [vmem:[%s339 + $0xd0] sm:$0xff]
                  %368 = vst [vmem:[%s340 + $0x68] sm:$0xff] %v367
                  %v369 = vld [vmem:[%s339 + $0xe0] sm:$0xff]
                  %370 = vst [vmem:[%s340 + $0x70] sm:$0xff] %v369
                  %v371 = vld [vmem:[%s339 + $0xf0] sm:$0xff]
                  %372 = vst [vmem:[%s340 + $0x78] sm:$0xff] %v371
                  %v373 = vld [vmem:[%s339 + $0x100] sm:$0xff]
                  %374 = vst [vmem:[%s340 + $0x80] sm:$0xff] %v373
                  %v375 = vld [vmem:[%s339 + $0x110] sm:$0xff]
                  %376 = vst [vmem:[%s340 + $0x88] sm:$0xff] %v375
                  %v377 = vld [vmem:[%s339 + $0x120] sm:$0xff]
                  %378 = vst [vmem:[%s340 + $0x90] sm:$0xff] %v377
                  %v379 = vld [vmem:[%s339 + $0x130] sm:$0xff]
                  %380 = vst [vmem:[%s340 + $0x98] sm:$0xff] %v379
                  %v381 = vld [vmem:[%s339 + $0x140] sm:$0xff]
                  %382 = vst [vmem:[%s340 + $0xa0] sm:$0xff] %v381
                  %v383 = vld [vmem:[%s339 + $0x150] sm:$0xff]
                  %384 = vst [vmem:[%s340 + $0xa8] sm:$0xff] %v383
                  %v385 = vld [vmem:[%s339 + $0x160] sm:$0xff]
                  %386 = vst [vmem:[%s340 + $0xb0] sm:$0xff] %v385
                  %v387 = vld [vmem:[%s339 + $0x170] sm:$0xff]
                  %388 = vst [vmem:[%s340 + $0xb8] sm:$0xff] %v387
                  %v389 = vld [vmem:[%s339 + $0x180] sm:$0xff]
                  %390 = vst [vmem:[%s340 + $0xc0] sm:$0xff] %v389
                  %v391 = vld [vmem:[%s339 + $0x190] sm:$0xff]
                  %392 = vst [vmem:[%s340 + $0xc8] sm:$0xff] %v391
                  %v393 = vld [vmem:[%s339 + $0x1a0] sm:$0xff]
                  %394 = vst [vmem:[%s340 + $0xd0] sm:$0xff] %v393
                  %v395 = vld [vmem:[%s339 + $0x1b0] sm:$0xff]
                  %396 = vst [vmem:[%s340 + $0xd8] sm:$0xff] %v395
                  %v397 = vld [vmem:[%s339 + $0x1c0] sm:$0xff]
                  %398 = vst [vmem:[%s340 + $0xe0] sm:$0xff] %v397
                  %v399 = vld [vmem:[%s339 + $0x1d0] sm:$0xff]
                  %400 = vst [vmem:[%s340 + $0xe8] sm:$0xff] %v399
                  %v401 = vld [vmem:[%s339 + $0x1e0] sm:$0xff]
                  %402 = vst [vmem:[%s340 + $0xf0] sm:$0xff] %v401
                  %v403 = vld [vmem:[%s339 + $0x1f0] sm:$0xff]
                  %404 = vst [vmem:[%s340 + $0xf8] sm:$0xff] %v403
                  %v405 = vld [vmem:[%s339 + $0x200] sm:$0xff]
                  %406 = vst [vmem:[%s340 + $0x100] sm:$0xff] %v405
                  %v407 = vld [vmem:[%s339 + $0x210] sm:$0xff]
                  %408 = vst [vmem:[%s340 + $0x108] sm:$0xff] %v407
                  %v409 = vld [vmem:[%s339 + $0x220] sm:$0xff]
                  %410 = vst [vmem:[%s340 + $0x110] sm:$0xff] %v409
                  %v411 = vld [vmem:[%s339 + $0x230] sm:$0xff]
                  %412 = vst [vmem:[%s340 + $0x118] sm:$0xff] %v411
                  %v413 = vld [vmem:[%s339 + $0x240] sm:$0xff]
                  %414 = vst [vmem:[%s340 + $0x120] sm:$0xff] %v413
                  %v415 = vld [vmem:[%s339 + $0x250] sm:$0xff]
                  %416 = vst [vmem:[%s340 + $0x128] sm:$0xff] %v415
                  %v417 = vld [vmem:[%s339 + $0x260] sm:$0xff]
                  %418 = vst [vmem:[%s340 + $0x130] sm:$0xff] %v417
                  %v419 = vld [vmem:[%s339 + $0x270] sm:$0xff]
                  %420 = vst [vmem:[%s340 + $0x138] sm:$0xff] %v419
                  %v421 = vld [vmem:[%s339 + $0x280] sm:$0xff]
                  %422 = vst [vmem:[%s340 + $0x140] sm:$0xff] %v421
                  %v423 = vld [vmem:[%s339 + $0x290] sm:$0xff]
                  %424 = vst [vmem:[%s340 + $0x148] sm:$0xff] %v423
                  %v425 = vld [vmem:[%s339 + $0x2a0] sm:$0xff]
                  %426 = vst [vmem:[%s340 + $0x150] sm:$0xff] %v425
                  %v427 = vld [vmem:[%s339 + $0x2b0] sm:$0xff]
                  %428 = vst [vmem:[%s340 + $0x158] sm:$0xff] %v427
                  %v429 = vld [vmem:[%s339 + $0x2c0] sm:$0xff]
                  %430 = vst [vmem:[%s340 + $0x160] sm:$0xff] %v429
                  %v431 = vld [vmem:[%s339 + $0x2d0] sm:$0xff]
                  %432 = vst [vmem:[%s340 + $0x168] sm:$0xff] %v431
                  %v433 = vld [vmem:[%s339 + $0x2e0] sm:$0xff]
                  %434 = vst [vmem:[%s340 + $0x170] sm:$0xff] %v433
                  %v435 = vld [vmem:[%s339 + $0x2f0] sm:$0xff]
                  %436 = vst [vmem:[%s340 + $0x178] sm:$0xff] %v435
                  %v437 = vld [vmem:[%s339 + $0x300] sm:$0xff]
                  %438 = vst [vmem:[%s340 + $0x180] sm:$0xff] %v437
                  %v439 = vld [vmem:[%s339 + $0x310] sm:$0xff]
                  %440 = vst [vmem:[%s340 + $0x188] sm:$0xff] %v439
                  %v441 = vld [vmem:[%s339 + $0x320] sm:$0xff]
                  %442 = vst [vmem:[%s340 + $0x190] sm:$0xff] %v441
                  %v443 = vld [vmem:[%s339 + $0x330] sm:$0xff]
                  %444 = vst [vmem:[%s340 + $0x198] sm:$0xff] %v443
                  %v445 = vld [vmem:[%s339 + $0x340] sm:$0xff]
                  %446 = vst [vmem:[%s340 + $0x1a0] sm:$0xff] %v445
                  %v447 = vld [vmem:[%s339 + $0x350] sm:$0xff]
                  %448 = vst [vmem:[%s340 + $0x1a8] sm:$0xff] %v447
                  %v449 = vld [vmem:[%s339 + $0x360] sm:$0xff]
                  %450 = vst [vmem:[%s340 + $0x1b0] sm:$0xff] %v449
                  %v451 = vld [vmem:[%s339 + $0x370] sm:$0xff]
                  %452 = vst [vmem:[%s340 + $0x1b8] sm:$0xff] %v451
                  %v453 = vld [vmem:[%s339 + $0x380] sm:$0xff]
                  %454 = vst [vmem:[%s340 + $0x1c0] sm:$0xff] %v453
                  %v455 = vld [vmem:[%s339 + $0x390] sm:$0xff]
                  %456 = vst [vmem:[%s340 + $0x1c8] sm:$0xff] %v455
                  %v457 = vld [vmem:[%s339 + $0x3a0] sm:$0xff]
                  %458 = vst [vmem:[%s340 + $0x1d0] sm:$0xff] %v457
                  %v459 = vld [vmem:[%s339 + $0x3b0] sm:$0xff]
                  %460 = vst [vmem:[%s340 + $0x1d8] sm:$0xff] %v459
                  %v461 = vld [vmem:[%s339 + $0x3c0] sm:$0xff]
                  %462 = vst [vmem:[%s340 + $0x1e0] sm:$0xff] %v461
                  %v463 = vld [vmem:[%s339 + $0x3d0] sm:$0xff]
                  %464 = vst [vmem:[%s340 + $0x1e8] sm:$0xff] %v463
                  %v465 = vld [vmem:[%s339 + $0x3e0] sm:$0xff]
                  %466 = vst [vmem:[%s340 + $0x1f0] sm:$0xff] %v465
                  %v467 = vld [vmem:[%s339 + $0x3f0] sm:$0xff]
                  %468 = vst [vmem:[%s340 + $0x1f8] sm:$0xff] %v467
                $region52: #{linear_pallas.1} parent=46 // loop_footer
                  %s338 = sadd.s32 1, %s334
                $region53: #{linear_pallas.1} parent=46 // loop_footer_branch
                  %333 = sbr.rel target = $region49
                $region54: #{linear_pallas.1} parent=46 // loop_exit
                  _
              $region47: #{linear_pallas.1} parent=31 // pred_fallthru
                _
              // Predicated region
              $region55: #{linear_pallas.1} parent=31 // pred_check
                _
              $region56: #{linear_pallas.1} parent=31 // pred_check_branch
                %470 = sbr.rel target = $region58
              $region57: #{linear_pallas.1} parent=31 // pred_region
                _
              $region58: #{linear_pallas.1} parent=31 // pred_fallthru
                _
            $region32: #{linear_pallas.1} parent=27 // pred_fallthru
              _
            // Predicated region
            $region33: #{linear_pallas.1} parent=27 // pred_check
              _
            $region34: #{linear_pallas.1} parent=27 // pred_check_branch
              %193 = sbr.rel target = $region36
            $region35: #{linear_pallas.1} parent=27 // pred_region
              loop: start=0, step=1, limit=1
              $region37: #{linear_pallas.1} parent=35 // loop_pre_header
                _
              $region38: #{linear_pallas.1} parent=35 // loop_header
                %s196 = sphi 0, %s200
                %p197 = scmp.ge.s32.totalorder %s196, 1
                %s201 = sphi %s187, %s187
                %s202 = sphi %s181, %s181
              $region39: #{linear_pallas.1} parent=35 // loop_header_branch
                %199 = sbr.rel (%p197) target = $region43
              $region40: #{linear_pallas.1} parent=35 // loop_body
                %v203 = vld [vmem:[%s201] sm:$0xff]
                %204 = vst [vmem:[%s202] sm:$0xff] %v203
                %v205 = vld [vmem:[%s201 + $0x10] sm:$0xff]
                %206 = vst [vmem:[%s202 + $0x8] sm:$0xff] %v205
                %v207 = vld [vmem:[%s201 + $0x20] sm:$0xff]
                %208 = vst [vmem:[%s202 + $0x10] sm:$0xff] %v207
                %v209 = vld [vmem:[%s201 + $0x30] sm:$0xff]
                %210 = vst [vmem:[%s202 + $0x18] sm:$0xff] %v209
                %v211 = vld [vmem:[%s201 + $0x40] sm:$0xff]
                %212 = vst [vmem:[%s202 + $0x20] sm:$0xff] %v211
                %v213 = vld [vmem:[%s201 + $0x50] sm:$0xff]
                %214 = vst [vmem:[%s202 + $0x28] sm:$0xff] %v213
                %v215 = vld [vmem:[%s201 + $0x60] sm:$0xff]
                %216 = vst [vmem:[%s202 + $0x30] sm:$0xff] %v215
                %v217 = vld [vmem:[%s201 + $0x70] sm:$0xff]
                %218 = vst [vmem:[%s202 + $0x38] sm:$0xff] %v217
                %v219 = vld [vmem:[%s201 + $0x80] sm:$0xff]
                %220 = vst [vmem:[%s202 + $0x40] sm:$0xff] %v219
                %v221 = vld [vmem:[%s201 + $0x90] sm:$0xff]
                %222 = vst [vmem:[%s202 + $0x48] sm:$0xff] %v221
                %v223 = vld [vmem:[%s201 + $0xa0] sm:$0xff]
                %224 = vst [vmem:[%s202 + $0x50] sm:$0xff] %v223
                %v225 = vld [vmem:[%s201 + $0xb0] sm:$0xff]
                %226 = vst [vmem:[%s202 + $0x58] sm:$0xff] %v225
                %v227 = vld [vmem:[%s201 + $0xc0] sm:$0xff]
                %228 = vst [vmem:[%s202 + $0x60] sm:$0xff] %v227
                %v229 = vld [vmem:[%s201 + $0xd0] sm:$0xff]
                %230 = vst [vmem:[%s202 + $0x68] sm:$0xff] %v229
                %v231 = vld [vmem:[%s201 + $0xe0] sm:$0xff]
                %232 = vst [vmem:[%s202 + $0x70] sm:$0xff] %v231
                %v233 = vld [vmem:[%s201 + $0xf0] sm:$0xff]
                %234 = vst [vmem:[%s202 + $0x78] sm:$0xff] %v233
                %v235 = vld [vmem:[%s201 + $0x100] sm:$0xff]
                %236 = vst [vmem:[%s202 + $0x80] sm:$0xff] %v235
                %v237 = vld [vmem:[%s201 + $0x110] sm:$0xff]
                %238 = vst [vmem:[%s202 + $0x88] sm:$0xff] %v237
                %v239 = vld [vmem:[%s201 + $0x120] sm:$0xff]
                %240 = vst [vmem:[%s202 + $0x90] sm:$0xff] %v239
                %v241 = vld [vmem:[%s201 + $0x130] sm:$0xff]
                %242 = vst [vmem:[%s202 + $0x98] sm:$0xff] %v241
                %v243 = vld [vmem:[%s201 + $0x140] sm:$0xff]
                %244 = vst [vmem:[%s202 + $0xa0] sm:$0xff] %v243
                %v245 = vld [vmem:[%s201 + $0x150] sm:$0xff]
                %246 = vst [vmem:[%s202 + $0xa8] sm:$0xff] %v245
                %v247 = vld [vmem:[%s201 + $0x160] sm:$0xff]
                %248 = vst [vmem:[%s202 + $0xb0] sm:$0xff] %v247
                %v249 = vld [vmem:[%s201 + $0x170] sm:$0xff]
                %250 = vst [vmem:[%s202 + $0xb8] sm:$0xff] %v249
                %v251 = vld [vmem:[%s201 + $0x180] sm:$0xff]
                %252 = vst [vmem:[%s202 + $0xc0] sm:$0xff] %v251
                %v253 = vld [vmem:[%s201 + $0x190] sm:$0xff]
                %254 = vst [vmem:[%s202 + $0xc8] sm:$0xff] %v253
                %v255 = vld [vmem:[%s201 + $0x1a0] sm:$0xff]
                %256 = vst [vmem:[%s202 + $0xd0] sm:$0xff] %v255
                %v257 = vld [vmem:[%s201 + $0x1b0] sm:$0xff]
                %258 = vst [vmem:[%s202 + $0xd8] sm:$0xff] %v257
                %v259 = vld [vmem:[%s201 + $0x1c0] sm:$0xff]
                %260 = vst [vmem:[%s202 + $0xe0] sm:$0xff] %v259
                %v261 = vld [vmem:[%s201 + $0x1d0] sm:$0xff]
                %262 = vst [vmem:[%s202 + $0xe8] sm:$0xff] %v261
                %v263 = vld [vmem:[%s201 + $0x1e0] sm:$0xff]
                %264 = vst [vmem:[%s202 + $0xf0] sm:$0xff] %v263
                %v265 = vld [vmem:[%s201 + $0x1f0] sm:$0xff]
                %266 = vst [vmem:[%s202 + $0xf8] sm:$0xff] %v265
                %v267 = vld [vmem:[%s201 + $0x200] sm:$0xff]
                %268 = vst [vmem:[%s202 + $0x100] sm:$0xff] %v267
                %v269 = vld [vmem:[%s201 + $0x210] sm:$0xff]
                %270 = vst [vmem:[%s202 + $0x108] sm:$0xff] %v269
                %v271 = vld [vmem:[%s201 + $0x220] sm:$0xff]
                %272 = vst [vmem:[%s202 + $0x110] sm:$0xff] %v271
                %v273 = vld [vmem:[%s201 + $0x230] sm:$0xff]
                %274 = vst [vmem:[%s202 + $0x118] sm:$0xff] %v273
                %v275 = vld [vmem:[%s201 + $0x240] sm:$0xff]
                %276 = vst [vmem:[%s202 + $0x120] sm:$0xff] %v275
                %v277 = vld [vmem:[%s201 + $0x250] sm:$0xff]
                %278 = vst [vmem:[%s202 + $0x128] sm:$0xff] %v277
                %v279 = vld [vmem:[%s201 + $0x260] sm:$0xff]
                %280 = vst [vmem:[%s202 + $0x130] sm:$0xff] %v279
                %v281 = vld [vmem:[%s201 + $0x270] sm:$0xff]
                %282 = vst [vmem:[%s202 + $0x138] sm:$0xff] %v281
                %v283 = vld [vmem:[%s201 + $0x280] sm:$0xff]
                %284 = vst [vmem:[%s202 + $0x140] sm:$0xff] %v283
                %v285 = vld [vmem:[%s201 + $0x290] sm:$0xff]
                %286 = vst [vmem:[%s202 + $0x148] sm:$0xff] %v285
                %v287 = vld [vmem:[%s201 + $0x2a0] sm:$0xff]
                %288 = vst [vmem:[%s202 + $0x150] sm:$0xff] %v287
                %v289 = vld [vmem:[%s201 + $0x2b0] sm:$0xff]
                %290 = vst [vmem:[%s202 + $0x158] sm:$0xff] %v289
                %v291 = vld [vmem:[%s201 + $0x2c0] sm:$0xff]
                %292 = vst [vmem:[%s202 + $0x160] sm:$0xff] %v291
                %v293 = vld [vmem:[%s201 + $0x2d0] sm:$0xff]
                %294 = vst [vmem:[%s202 + $0x168] sm:$0xff] %v293
                %v295 = vld [vmem:[%s201 + $0x2e0] sm:$0xff]
                %296 = vst [vmem:[%s202 + $0x170] sm:$0xff] %v295
                %v297 = vld [vmem:[%s201 + $0x2f0] sm:$0xff]
                %298 = vst [vmem:[%s202 + $0x178] sm:$0xff] %v297
                %v299 = vld [vmem:[%s201 + $0x300] sm:$0xff]
                %300 = vst [vmem:[%s202 + $0x180] sm:$0xff] %v299
                %v301 = vld [vmem:[%s201 + $0x310] sm:$0xff]
                %302 = vst [vmem:[%s202 + $0x188] sm:$0xff] %v301
                %v303 = vld [vmem:[%s201 + $0x320] sm:$0xff]
                %304 = vst [vmem:[%s202 + $0x190] sm:$0xff] %v303
                %v305 = vld [vmem:[%s201 + $0x330] sm:$0xff]
                %306 = vst [vmem:[%s202 + $0x198] sm:$0xff] %v305
                %v307 = vld [vmem:[%s201 + $0x340] sm:$0xff]
                %308 = vst [vmem:[%s202 + $0x1a0] sm:$0xff] %v307
                %v309 = vld [vmem:[%s201 + $0x350] sm:$0xff]
                %310 = vst [vmem:[%s202 + $0x1a8] sm:$0xff] %v309
                %v311 = vld [vmem:[%s201 + $0x360] sm:$0xff]
                %312 = vst [vmem:[%s202 + $0x1b0] sm:$0xff] %v311
                %v313 = vld [vmem:[%s201 + $0x370] sm:$0xff]
                %314 = vst [vmem:[%s202 + $0x1b8] sm:$0xff] %v313
                %v315 = vld [vmem:[%s201 + $0x380] sm:$0xff]
                %316 = vst [vmem:[%s202 + $0x1c0] sm:$0xff] %v315
                %v317 = vld [vmem:[%s201 + $0x390] sm:$0xff]
                %318 = vst [vmem:[%s202 + $0x1c8] sm:$0xff] %v317
                %v319 = vld [vmem:[%s201 + $0x3a0] sm:$0xff]
                %320 = vst [vmem:[%s202 + $0x1d0] sm:$0xff] %v319
                %v321 = vld [vmem:[%s201 + $0x3b0] sm:$0xff]
                %322 = vst [vmem:[%s202 + $0x1d8] sm:$0xff] %v321
                %v323 = vld [vmem:[%s201 + $0x3c0] sm:$0xff]
                %324 = vst [vmem:[%s202 + $0x1e0] sm:$0xff] %v323
                %v325 = vld [vmem:[%s201 + $0x3d0] sm:$0xff]
                %326 = vst [vmem:[%s202 + $0x1e8] sm:$0xff] %v325
                %v327 = vld [vmem:[%s201 + $0x3e0] sm:$0xff]
                %328 = vst [vmem:[%s202 + $0x1f0] sm:$0xff] %v327
                %v329 = vld [vmem:[%s201 + $0x3f0] sm:$0xff]
                %330 = vst [vmem:[%s202 + $0x1f8] sm:$0xff] %v329
              $region41: #{linear_pallas.1} parent=35 // loop_footer
                %s200 = sadd.s32 1, %s196
              $region42: #{linear_pallas.1} parent=35 // loop_footer_branch
                %195 = sbr.rel target = $region38
              $region43: #{linear_pallas.1} parent=35 // loop_exit
                _
            $region36: #{linear_pallas.1} parent=27 // pred_fallthru
              _
          $region28: #{linear_pallas.1} parent=23 // pred_fallthru
            _
          %471 = vnop
        $region24: #{linear_pallas.1} parent=19 // pred_fallthru
          _
        // Predicated region
        $region59: #{linear_pallas.1} parent=19 // pred_check
          %p472 = pneg %p107
        $region60: #{linear_pallas.1} parent=19 // pred_check_branch
          %474 = sbr.rel (%p472) target = $region62
        $region61: #{linear_pallas.1} parent=19 // pred_region
          %s475 = smul.u32 2, %s20
          %p476 = scmp.lt.s32.totalorder %s475, 3
          %s477 = scalar_select %p476, %s475, 3
          %s478 = scalar_lea.vmem %s2, %s477
          %s479 = smul.u32 2, %s20
        $region62: #{linear_pallas.1} parent=19 // pred_fallthru
          _
      $region20: #{linear_pallas.1} parent=5 // pred_fallthru
        _
      %p480 = scmp.le.s32.totalorder 1, %s12
      %p481 = scmp.lt.s32.totalorder %s12, 3
      %p482 = pnand %p480, %p481
      %p483 = pneg %p482
      // Predicated region
      $region63: #{linear_pallas.1} parent=5 // pred_check
        _
      $region64: #{linear_pallas.1} parent=5 // pred_check_branch
        %485 = sbr.rel (%p482) target = $region66
      $region65: #{linear_pallas.1} parent=5 // pred_region
        %s486 = ssub.s32 %s12, 1
        %s487 = sand.u32 %s74, 1
        %s488 = sand.u32 %s74, 1
        %s489 = smul.addr %s488, 512
        %s490 = scalar_lea.vmem [#allocation2], %s489
        // Predicated region
        $region67: #{linear_pallas.1} parent=65 // pred_check
          %p491 = pneg %p87
        $region68: #{linear_pallas.1} parent=65 // pred_check_branch
          %493 = sbr.rel (%p491) target = $region70
        $region69: #{linear_pallas.1} parent=65 // pred_region
          _
        $region70: #{linear_pallas.1} parent=65 // pred_fallthru
          _
        %s494 = smul.u32 32, %s22
        %s495 = smul.u32 4, %s24
        %p496 = scmp.lt.s32.totalorder %s494, 31
        %s497 = scalar_select %p496, %s494, 31
        %p498 = scmp.lt.s32.totalorder %s495, 3
        %s499 = scalar_select %p498, %s495, 3
        %s500 = smul.addr %s497, 4
        %s501 = sadd.s32 %s499, %s500
        %s502 = smul.addr %s501, 4
        %s503 = scalar_lea.vmem %s0, %s502
        %p504 = pneg %p59
        %p505 = pneg %p56
        %s506 = sand.u32 %s74, 1
        %s507 = sand.u32 %s74, 1
        %s508 = smul.addr %s507, 512
        %s509 = scalar_lea.vmem [#allocation2], %s508
        %p510 = pneg %p87
        %p511 = pneg %p84
        %s512 = smul.u32 2, %s23
        %p513 = scmp.lt.s32.totalorder %s512, 3
        %s514 = scalar_select %p513, %s512, 3
        %s515 = scalar_lea.vmem %s2, %s514
        %p516 = pneg %p113
        %p517 = pneg %p110
        %p518 = pneg %p141
        %p519 = pneg %p138
        %s520 = sand.u32 %s128, 1
        %s521 = scalar_lea.sflag [#allocation4], %s520
        %s522 = sand.u32 %s128, 1
        %s523 = smul.addr %s522, 512
        %s524 = scalar_lea.vmem [#allocation3], %s523
        %s525 = smul.u32 32, %s22
        %s526 = smul.u32 4, %s24
        %p527 = scmp.lt.s32.totalorder %s525, 31
        %s528 = scalar_select %p527, %s525, 31
        %p529 = scmp.lt.s32.totalorder %s526, 3
        %s530 = scalar_select %p529, %s526, 3
        %s531 = smul.addr %s528, 4
        %s532 = sadd.s32 %s530, %s531
        %s533 = smul.addr %s532, 4
        %s534 = scalar_lea.vmem %s0, %s533
        %s535 = smul.u32 32, %s22
        %s536 = smul.u32 4, %s24
        %s537 = smul.u32 64, %s24
        %s538 = smul.u32 2, %s23
        %s539 = smul.u32 2, %s23
        %p540 = scmp.lt.s32.totalorder %s539, 3
        %s541 = scalar_select %p540, %s539, 3
        %s542 = scalar_lea.vmem %s2, %s541
        %s543 = smul.u32 2, %s23
        %s544 = smul.u32 32, %s22
        %s545 = smul.u32 2, %s23
        %p546 = scmp.eq.s32.totalorder %s24, 0
        // Predicated region
        $region71: #{linear_pallas.1} parent=65 // pred_check
          %p547 = pneg %p546
        $region72: #{linear_pallas.1} parent=65 // pred_check_branch
          %549 = sbr.rel (%p547) target = $region74
        $region73: #{linear_pallas.1} parent=65 // pred_region
          %v550 = vld [vmem:[%s542] sm:$0x3]
          %v552 = vlaneseq
          %v553 = vshrl.u32 %v552, 7
          %v554 = vsub.s32 0, %v553
          %v555 = vrot.slane %v550, %v554
          %v556 = vlaneseq
          %v557 = vshrl.u32 %v556, 7
          %v558 = vsub.s32 1, %v557
          %v559 = vrot.slane %v550, %v558
          %562 = vst [vmem:[%s524] sm:$0xff] %v555
          %563 = vst [vmem:[%s524 + $0x8] sm:$0xff] %v559
          %564 = vst [vmem:[%s524 + $0x10] sm:$0xff] %v555
          %565 = vst [vmem:[%s524 + $0x18] sm:$0xff] %v559
          %566 = vst [vmem:[%s524 + $0x20] sm:$0xff] %v555
          %567 = vst [vmem:[%s524 + $0x28] sm:$0xff] %v559
          %568 = vst [vmem:[%s524 + $0x30] sm:$0xff] %v555
          %569 = vst [vmem:[%s524 + $0x38] sm:$0xff] %v559
          %570 = vst [vmem:[%s524 + $0x40] sm:$0xff] %v555
          %571 = vst [vmem:[%s524 + $0x48] sm:$0xff] %v559
          %572 = vst [vmem:[%s524 + $0x50] sm:$0xff] %v555
          %573 = vst [vmem:[%s524 + $0x58] sm:$0xff] %v559
          %574 = vst [vmem:[%s524 + $0x60] sm:$0xff] %v555
          %575 = vst [vmem:[%s524 + $0x68] sm:$0xff] %v559
          %576 = vst [vmem:[%s524 + $0x70] sm:$0xff] %v555
          %577 = vst [vmem:[%s524 + $0x78] sm:$0xff] %v559
          %578 = vst [vmem:[%s524 + $0x80] sm:$0xff] %v555
          %579 = vst [vmem:[%s524 + $0x88] sm:$0xff] %v559
          %580 = vst [vmem:[%s524 + $0x90] sm:$0xff] %v555
          %581 = vst [vmem:[%s524 + $0x98] sm:$0xff] %v559
          %582 = vst [vmem:[%s524 + $0xa0] sm:$0xff] %v555
          %583 = vst [vmem:[%s524 + $0xa8] sm:$0xff] %v559
          %584 = vst [vmem:[%s524 + $0xb0] sm:$0xff] %v555
          %585 = vst [vmem:[%s524 + $0xb8] sm:$0xff] %v559
          %586 = vst [vmem:[%s524 + $0xc0] sm:$0xff] %v555
          %587 = vst [vmem:[%s524 + $0xc8] sm:$0xff] %v559
          %588 = vst [vmem:[%s524 + $0xd0] sm:$0xff] %v555
          %589 = vst [vmem:[%s524 + $0xd8] sm:$0xff] %v559
          %590 = vst [vmem:[%s524 + $0xe0] sm:$0xff] %v555
          %591 = vst [vmem:[%s524 + $0xe8] sm:$0xff] %v559
          %592 = vst [vmem:[%s524 + $0xf0] sm:$0xff] %v555
          %593 = vst [vmem:[%s524 + $0xf8] sm:$0xff] %v559
          %594 = vst [vmem:[%s524 + $0x100] sm:$0xff] %v555
          %595 = vst [vmem:[%s524 + $0x108] sm:$0xff] %v559
          %596 = vst [vmem:[%s524 + $0x110] sm:$0xff] %v555
          %597 = vst [vmem:[%s524 + $0x118] sm:$0xff] %v559
          %598 = vst [vmem:[%s524 + $0x120] sm:$0xff] %v555
          %599 = vst [vmem:[%s524 + $0x128] sm:$0xff] %v559
          %600 = vst [vmem:[%s524 + $0x130] sm:$0xff] %v555
          %601 = vst [vmem:[%s524 + $0x138] sm:$0xff] %v559
          %602 = vst [vmem:[%s524 + $0x140] sm:$0xff] %v555
          %603 = vst [vmem:[%s524 + $0x148] sm:$0xff] %v559
          %604 = vst [vmem:[%s524 + $0x150] sm:$0xff] %v555
          %605 = vst [vmem:[%s524 + $0x158] sm:$0xff] %v559
          %606 = vst [vmem:[%s524 + $0x160] sm:$0xff] %v555
          %607 = vst [vmem:[%s524 + $0x168] sm:$0xff] %v559
          %608 = vst [vmem:[%s524 + $0x170] sm:$0xff] %v555
          %609 = vst [vmem:[%s524 + $0x178] sm:$0xff] %v559
          %610 = vst [vmem:[%s524 + $0x180] sm:$0xff] %v555
          %611 = vst [vmem:[%s524 + $0x188] sm:$0xff] %v559
          %612 = vst [vmem:[%s524 + $0x190] sm:$0xff] %v555
          %613 = vst [vmem:[%s524 + $0x198] sm:$0xff] %v559
          %614 = vst [vmem:[%s524 + $0x1a0] sm:$0xff] %v555
          %615 = vst [vmem:[%s524 + $0x1a8] sm:$0xff] %v559
          %616 = vst [vmem:[%s524 + $0x1b0] sm:$0xff] %v555
          %617 = vst [vmem:[%s524 + $0x1b8] sm:$0xff] %v559
          %618 = vst [vmem:[%s524 + $0x1c0] sm:$0xff] %v555
          %619 = vst [vmem:[%s524 + $0x1c8] sm:$0xff] %v559
          %620 = vst [vmem:[%s524 + $0x1d0] sm:$0xff] %v555
          %621 = vst [vmem:[%s524 + $0x1d8] sm:$0xff] %v559
          %622 = vst [vmem:[%s524 + $0x1e0] sm:$0xff] %v555
          %623 = vst [vmem:[%s524 + $0x1e8] sm:$0xff] %v559
          %624 = vst [vmem:[%s524 + $0x1f0] sm:$0xff] %v555
          %625 = vst [vmem:[%s524 + $0x1f8] sm:$0xff] %v559
        $region74: #{linear_pallas.1} parent=65 // pred_fallthru
          _
        %v626 = vld [vmem:[%s524] sm:$0xff]
        %v627 = vld [vmem:[%s524 + $0x8] sm:$0xff]
        %v628 = vld [vmem:[%s524 + $0x10] sm:$0xff]
        %v629 = vld [vmem:[%s524 + $0x18] sm:$0xff]
        %v630 = vld [vmem:[%s524 + $0x20] sm:$0xff]
        %v631 = vld [vmem:[%s524 + $0x28] sm:$0xff]
        %v632 = vld [vmem:[%s524 + $0x30] sm:$0xff]
        %v633 = vld [vmem:[%s524 + $0x38] sm:$0xff]
        %v634 = vld [vmem:[%s524 + $0x40] sm:$0xff]
        %v635 = vld [vmem:[%s524 + $0x48] sm:$0xff]
        %v636 = vld [vmem:[%s524 + $0x50] sm:$0xff]
        %v637 = vld [vmem:[%s524 + $0x58] sm:$0xff]
        %v638 = vld [vmem:[%s524 + $0x60] sm:$0xff]
        %v639 = vld [vmem:[%s524 + $0x68] sm:$0xff]
        %v640 = vld [vmem:[%s524 + $0x70] sm:$0xff]
        %v641 = vld [vmem:[%s524 + $0x78] sm:$0xff]
        %v642 = vld [vmem:[%s524 + $0x80] sm:$0xff]
        %v643 = vld [vmem:[%s524 + $0x88] sm:$0xff]
        %v644 = vld [vmem:[%s524 + $0x90] sm:$0xff]
        %v645 = vld [vmem:[%s524 + $0x98] sm:$0xff]
        %v646 = vld [vmem:[%s524 + $0xa0] sm:$0xff]
        %v647 = vld [vmem:[%s524 + $0xa8] sm:$0xff]
        %v648 = vld [vmem:[%s524 + $0xb0] sm:$0xff]
        %v649 = vld [vmem:[%s524 + $0xb8] sm:$0xff]
        %v650 = vld [vmem:[%s524 + $0xc0] sm:$0xff]
        %v651 = vld [vmem:[%s524 + $0xc8] sm:$0xff]
        %v652 = vld [vmem:[%s524 + $0xd0] sm:$0xff]
        %v653 = vld [vmem:[%s524 + $0xd8] sm:$0xff]
        %v654 = vld [vmem:[%s524 + $0xe0] sm:$0xff]
        %v655 = vld [vmem:[%s524 + $0xe8] sm:$0xff]
        %v656 = vld [vmem:[%s524 + $0xf0] sm:$0xff]
        %v657 = vld [vmem:[%s524 + $0xf8] sm:$0xff]
        %v658 = vld [vmem:[%s524 + $0x100] sm:$0xff]
        %v659 = vld [vmem:[%s524 + $0x108] sm:$0xff]
        %v660 = vld [vmem:[%s524 + $0x110] sm:$0xff]
        %v661 = vld [vmem:[%s524 + $0x118] sm:$0xff]
        %v662 = vld [vmem:[%s524 + $0x120] sm:$0xff]
        %v663 = vld [vmem:[%s524 + $0x128] sm:$0xff]
        %v664 = vld [vmem:[%s524 + $0x130] sm:$0xff]
        %v665 = vld [vmem:[%s524 + $0x138] sm:$0xff]
        %v666 = vld [vmem:[%s524 + $0x140] sm:$0xff]
        %v667 = vld [vmem:[%s524 + $0x148] sm:$0xff]
        %v668 = vld [vmem:[%s524 + $0x150] sm:$0xff]
        %v669 = vld [vmem:[%s524 + $0x158] sm:$0xff]
        %v670 = vld [vmem:[%s524 + $0x160] sm:$0xff]
        %v671 = vld [vmem:[%s524 + $0x168] sm:$0xff]
        %v672 = vld [vmem:[%s524 + $0x170] sm:$0xff]
        %v673 = vld [vmem:[%s524 + $0x178] sm:$0xff]
        %v674 = vld [vmem:[%s524 + $0x180] sm:$0xff]
        %v675 = vld [vmem:[%s524 + $0x188] sm:$0xff]
        %v676 = vld [vmem:[%s524 + $0x190] sm:$0xff]
        %v677 = vld [vmem:[%s524 + $0x198] sm:$0xff]
        %v678 = vld [vmem:[%s524 + $0x1a0] sm:$0xff]
        %v679 = vld [vmem:[%s524 + $0x1a8] sm:$0xff]
        %v680 = vld [vmem:[%s524 + $0x1b0] sm:$0xff]
        %v681 = vld [vmem:[%s524 + $0x1b8] sm:$0xff]
        %v682 = vld [vmem:[%s524 + $0x1c0] sm:$0xff]
        %v683 = vld [vmem:[%s524 + $0x1c8] sm:$0xff]
        %v684 = vld [vmem:[%s524 + $0x1d0] sm:$0xff]
        %v685 = vld [vmem:[%s524 + $0x1d8] sm:$0xff]
        %v686 = vld [vmem:[%s524 + $0x1e0] sm:$0xff]
        %v687 = vld [vmem:[%s524 + $0x1e8] sm:$0xff]
        %v688 = vld [vmem:[%s524 + $0x1f0] sm:$0xff]
        %v689 = vld [vmem:[%s524 + $0x1f8] sm:$0xff]
        %v690 = vld [vmem:[%s534] sm:$0xff]
        %v691 = vld [vmem:[%s534 + $0x8] sm:$0xff]
        %v692 = vld [vmem:[%s534 + $0x10] sm:$0xff]
        %v693 = vld [vmem:[%s534 + $0x18] sm:$0xff]
        %v694 = vld [vmem:[%s534 + $0x20] sm:$0xff]
        %v695 = vld [vmem:[%s534 + $0x28] sm:$0xff]
        %v696 = vld [vmem:[%s534 + $0x30] sm:$0xff]
        %v697 = vld [vmem:[%s534 + $0x38] sm:$0xff]
        %v698 = vld [vmem:[%s534 + $0x40] sm:$0xff]
        %v699 = vld [vmem:[%s534 + $0x48] sm:$0xff]
        %v700 = vld [vmem:[%s534 + $0x50] sm:$0xff]
        %v701 = vld [vmem:[%s534 + $0x58] sm:$0xff]
        %v702 = vld [vmem:[%s534 + $0x60] sm:$0xff]
        %v703 = vld [vmem:[%s534 + $0x68] sm:$0xff]
        %v704 = vld [vmem:[%s534 + $0x70] sm:$0xff]
        %v705 = vld [vmem:[%s534 + $0x78] sm:$0xff]
        %v706 = vld [vmem:[%s534 + $0x80] sm:$0xff]
        %v707 = vld [vmem:[%s534 + $0x88] sm:$0xff]
        %v708 = vld [vmem:[%s534 + $0x90] sm:$0xff]
        %v709 = vld [vmem:[%s534 + $0x98] sm:$0xff]
        %v710 = vld [vmem:[%s534 + $0xa0] sm:$0xff]
        %v711 = vld [vmem:[%s534 + $0xa8] sm:$0xff]
        %v712 = vld [vmem:[%s534 + $0xb0] sm:$0xff]
        %v713 = vld [vmem:[%s534 + $0xb8] sm:$0xff]
        %v714 = vld [vmem:[%s534 + $0xc0] sm:$0xff]
        %v715 = vld [vmem:[%s534 + $0xc8] sm:$0xff]
        %v716 = vld [vmem:[%s534 + $0xd0] sm:$0xff]
        %v717 = vld [vmem:[%s534 + $0xd8] sm:$0xff]
        %v718 = vld [vmem:[%s534 + $0xe0] sm:$0xff]
        %v719 = vld [vmem:[%s534 + $0xe8] sm:$0xff]
        %v720 = vld [vmem:[%s534 + $0xf0] sm:$0xff]
        %v721 = vld [vmem:[%s534 + $0xf8] sm:$0xff]
        %v722 = vld [vmem:[%s534 + $0x100] sm:$0xff]
        %v723 = vld [vmem:[%s534 + $0x108] sm:$0xff]
        %v724 = vld [vmem:[%s534 + $0x110] sm:$0xff]
        %v725 = vld [vmem:[%s534 + $0x118] sm:$0xff]
        %v726 = vld [vmem:[%s534 + $0x120] sm:$0xff]
        %v727 = vld [vmem:[%s534 + $0x128] sm:$0xff]
        %v728 = vld [vmem:[%s534 + $0x130] sm:$0xff]
        %v729 = vld [vmem:[%s534 + $0x138] sm:$0xff]
        %v730 = vld [vmem:[%s534 + $0x140] sm:$0xff]
        %v731 = vld [vmem:[%s534 + $0x148] sm:$0xff]
        %v732 = vld [vmem:[%s534 + $0x150] sm:$0xff]
        %v733 = vld [vmem:[%s534 + $0x158] sm:$0xff]
        %v734 = vld [vmem:[%s534 + $0x160] sm:$0xff]
        %v735 = vld [vmem:[%s534 + $0x168] sm:$0xff]
        %v736 = vld [vmem:[%s534 + $0x170] sm:$0xff]
        %v737 = vld [vmem:[%s534 + $0x178] sm:$0xff]
        %v738 = vld [vmem:[%s534 + $0x180] sm:$0xff]
        %v739 = vld [vmem:[%s534 + $0x188] sm:$0xff]
        %v740 = vld [vmem:[%s534 + $0x190] sm:$0xff]
        %v741 = vld [vmem:[%s534 + $0x198] sm:$0xff]
        %v742 = vld [vmem:[%s534 + $0x1a0] sm:$0xff]
        %v743 = vld [vmem:[%s534 + $0x1a8] sm:$0xff]
        %v744 = vld [vmem:[%s534 + $0x1b0] sm:$0xff]
        %v745 = vld [vmem:[%s534 + $0x1b8] sm:$0xff]
        %v746 = vld [vmem:[%s534 + $0x1c0] sm:$0xff]
        %v747 = vld [vmem:[%s534 + $0x1c8] sm:$0xff]
        %v748 = vld [vmem:[%s534 + $0x1d0] sm:$0xff]
        %v749 = vld [vmem:[%s534 + $0x1d8] sm:$0xff]
        %v750 = vld [vmem:[%s534 + $0x1e0] sm:$0xff]
        %v751 = vld [vmem:[%s534 + $0x1e8] sm:$0xff]
        %v752 = vld [vmem:[%s534 + $0x1f0] sm:$0xff]
        %v753 = vld [vmem:[%s534 + $0x1f8] sm:$0xff]
        %v754 = vld [vmem:[%s490] sm:$0xff]
        %v755 = vld [vmem:[%s490 + $0x8] sm:$0xff]
        %v756 = vld [vmem:[%s490 + $0x10] sm:$0xff]
        %v757 = vld [vmem:[%s490 + $0x18] sm:$0xff]
        %v758 = vld [vmem:[%s490 + $0x20] sm:$0xff]
        %v759 = vld [vmem:[%s490 + $0x28] sm:$0xff]
        %v760 = vld [vmem:[%s490 + $0x30] sm:$0xff]
        %v761 = vld [vmem:[%s490 + $0x38] sm:$0xff]
        %v762 = vld [vmem:[%s490 + $0x40] sm:$0xff]
        %v763 = vld [vmem:[%s490 + $0x48] sm:$0xff]
        %v764 = vld [vmem:[%s490 + $0x50] sm:$0xff]
        %v765 = vld [vmem:[%s490 + $0x58] sm:$0xff]
        %v766 = vld [vmem:[%s490 + $0x60] sm:$0xff]
        %v767 = vld [vmem:[%s490 + $0x68] sm:$0xff]
        %v768 = vld [vmem:[%s490 + $0x70] sm:$0xff]
        %v769 = vld [vmem:[%s490 + $0x78] sm:$0xff]
        %v770 = vld [vmem:[%s490 + $0x80] sm:$0xff]
        %v771 = vld [vmem:[%s490 + $0x88] sm:$0xff]
        %v772 = vld [vmem:[%s490 + $0x90] sm:$0xff]
        %v773 = vld [vmem:[%s490 + $0x98] sm:$0xff]
        %v774 = vld [vmem:[%s490 + $0xa0] sm:$0xff]
        %v775 = vld [vmem:[%s490 + $0xa8] sm:$0xff]
        %v776 = vld [vmem:[%s490 + $0xb0] sm:$0xff]
        %v777 = vld [vmem:[%s490 + $0xb8] sm:$0xff]
        %v778 = vld [vmem:[%s490 + $0xc0] sm:$0xff]
        %v779 = vld [vmem:[%s490 + $0xc8] sm:$0xff]
        %v780 = vld [vmem:[%s490 + $0xd0] sm:$0xff]
        %v781 = vld [vmem:[%s490 + $0xd8] sm:$0xff]
        %v782 = vld [vmem:[%s490 + $0xe0] sm:$0xff]
        %v783 = vld [vmem:[%s490 + $0xe8] sm:$0xff]
        %v784 = vld [vmem:[%s490 + $0xf0] sm:$0xff]
        %v785 = vld [vmem:[%s490 + $0xf8] sm:$0xff]
        %v786 = vld [vmem:[%s490 + $0x100] sm:$0xff]
        %v787 = vld [vmem:[%s490 + $0x108] sm:$0xff]
        %v788 = vld [vmem:[%s490 + $0x110] sm:$0xff]
        %v789 = vld [vmem:[%s490 + $0x118] sm:$0xff]
        %v790 = vld [vmem:[%s490 + $0x120] sm:$0xff]
        %v791 = vld [vmem:[%s490 + $0x128] sm:$0xff]
        %v792 = vld [vmem:[%s490 + $0x130] sm:$0xff]
        %v793 = vld [vmem:[%s490 + $0x138] sm:$0xff]
        %v794 = vld [vmem:[%s490 + $0x140] sm:$0xff]
        %v795 = vld [vmem:[%s490 + $0x148] sm:$0xff]
        %v796 = vld [vmem:[%s490 + $0x150] sm:$0xff]
        %v797 = vld [vmem:[%s490 + $0x158] sm:$0xff]
        %v798 = vld [vmem:[%s490 + $0x160] sm:$0xff]
        %v799 = vld [vmem:[%s490 + $0x168] sm:$0xff]
        %v800 = vld [vmem:[%s490 + $0x170] sm:$0xff]
        %v801 = vld [vmem:[%s490 + $0x178] sm:$0xff]
        %v802 = vld [vmem:[%s490 + $0x180] sm:$0xff]
        %v803 = vld [vmem:[%s490 + $0x188] sm:$0xff]
        %v804 = vld [vmem:[%s490 + $0x190] sm:$0xff]
        %v805 = vld [vmem:[%s490 + $0x198] sm:$0xff]
        %v806 = vld [vmem:[%s490 + $0x1a0] sm:$0xff]
        %v807 = vld [vmem:[%s490 + $0x1a8] sm:$0xff]
        %v808 = vld [vmem:[%s490 + $0x1b0] sm:$0xff]
        %v809 = vld [vmem:[%s490 + $0x1b8] sm:$0xff]
        %v810 = vld [vmem:[%s490 + $0x1c0] sm:$0xff]
        %v811 = vld [vmem:[%s490 + $0x1c8] sm:$0xff]
        %v812 = vld [vmem:[%s490 + $0x1d0] sm:$0xff]
        %v813 = vld [vmem:[%s490 + $0x1d8] sm:$0xff]
        %v814 = vld [vmem:[%s490 + $0x1e0] sm:$0xff]
        %v815 = vld [vmem:[%s490 + $0x1e8] sm:$0xff]
        %v816 = vld [vmem:[%s490 + $0x1f0] sm:$0xff]
        %v817 = vld [vmem:[%s490 + $0x1f8] sm:$0xff]
        %v882 = vunpack.c.l.b16 %v690
        %v883 = vunpack.c.h.b16 %v690
        %v884 = vunpack.c.l.b16 %v691
        %v885 = vunpack.c.h.b16 %v691
        %v886 = vunpack.c.l.b16 %v692
        %v887 = vunpack.c.h.b16 %v692
        %v888 = vunpack.c.l.b16 %v693
        %v889 = vunpack.c.h.b16 %v693
        %v890 = vunpack.c.l.b16 %v694
        %v891 = vunpack.c.h.b16 %v694
        %v892 = vunpack.c.l.b16 %v695
        %v893 = vunpack.c.h.b16 %v695
        %v894 = vunpack.c.l.b16 %v696
        %v895 = vunpack.c.h.b16 %v696
        %v896 = vunpack.c.l.b16 %v697
        %v897 = vunpack.c.h.b16 %v697
        %v898 = vunpack.c.l.b16 %v698
        %v899 = vunpack.c.h.b16 %v698
        %v900 = vunpack.c.l.b16 %v699
        %v901 = vunpack.c.h.b16 %v699
        %v902 = vunpack.c.l.b16 %v700
        %v903 = vunpack.c.h.b16 %v700
        %v904 = vunpack.c.l.b16 %v701
        %v905 = vunpack.c.h.b16 %v701
        %v906 = vunpack.c.l.b16 %v702
        %v907 = vunpack.c.h.b16 %v702
        %v908 = vunpack.c.l.b16 %v703
        %v909 = vunpack.c.h.b16 %v703
        %v910 = vunpack.c.l.b16 %v704
        %v911 = vunpack.c.h.b16 %v704
        %v912 = vunpack.c.l.b16 %v705
        %v913 = vunpack.c.h.b16 %v705
        %v914 = vunpack.c.l.b16 %v706
        %v915 = vunpack.c.h.b16 %v706
        %v916 = vunpack.c.l.b16 %v707
        %v917 = vunpack.c.h.b16 %v707
        %v918 = vunpack.c.l.b16 %v708
        %v919 = vunpack.c.h.b16 %v708
        %v920 = vunpack.c.l.b16 %v709
        %v921 = vunpack.c.h.b16 %v709
        %v922 = vunpack.c.l.b16 %v710
        %v923 = vunpack.c.h.b16 %v710
        %v924 = vunpack.c.l.b16 %v711
        %v925 = vunpack.c.h.b16 %v711
        %v926 = vunpack.c.l.b16 %v712
        %v927 = vunpack.c.h.b16 %v712
        %v928 = vunpack.c.l.b16 %v713
        %v929 = vunpack.c.h.b16 %v713
        %v930 = vunpack.c.l.b16 %v714
        %v931 = vunpack.c.h.b16 %v714
        %v932 = vunpack.c.l.b16 %v715
        %v933 = vunpack.c.h.b16 %v715
        %v934 = vunpack.c.l.b16 %v716
        %v935 = vunpack.c.h.b16 %v716
        %v936 = vunpack.c.l.b16 %v717
        %v937 = vunpack.c.h.b16 %v717
        %v938 = vunpack.c.l.b16 %v718
        %v939 = vunpack.c.h.b16 %v718
        %v940 = vunpack.c.l.b16 %v719
        %v941 = vunpack.c.h.b16 %v719
        %v942 = vunpack.c.l.b16 %v720
        %v943 = vunpack.c.h.b16 %v720
        %v944 = vunpack.c.l.b16 %v721
        %v945 = vunpack.c.h.b16 %v721
        %v946 = vunpack.c.l.b16 %v722
        %v947 = vunpack.c.h.b16 %v722
        %v948 = vunpack.c.l.b16 %v723
        %v949 = vunpack.c.h.b16 %v723
        %v950 = vunpack.c.l.b16 %v724
        %v951 = vunpack.c.h.b16 %v724
        %v952 = vunpack.c.l.b16 %v725
        %v953 = vunpack.c.h.b16 %v725
        %v954 = vunpack.c.l.b16 %v726
        %v955 = vunpack.c.h.b16 %v726
        %v956 = vunpack.c.l.b16 %v727
        %v957 = vunpack.c.h.b16 %v727
        %v958 = vunpack.c.l.b16 %v728
        %v959 = vunpack.c.h.b16 %v728
        %v960 = vunpack.c.l.b16 %v729
        %v961 = vunpack.c.h.b16 %v729
        %v962 = vunpack.c.l.b16 %v730
        %v963 = vunpack.c.h.b16 %v730
        %v964 = vunpack.c.l.b16 %v731
        %v965 = vunpack.c.h.b16 %v731
        %v966 = vunpack.c.l.b16 %v732
        %v967 = vunpack.c.h.b16 %v732
        %v968 = vunpack.c.l.b16 %v733
        %v969 = vunpack.c.h.b16 %v733
        %v970 = vunpack.c.l.b16 %v734
        %v971 = vunpack.c.h.b16 %v734
        %v972 = vunpack.c.l.b16 %v735
        %v973 = vunpack.c.h.b16 %v735
        %v974 = vunpack.c.l.b16 %v736
        %v975 = vunpack.c.h.b16 %v736
        %v976 = vunpack.c.l.b16 %v737
        %v977 = vunpack.c.h.b16 %v737
        %v978 = vunpack.c.l.b16 %v738
        %v979 = vunpack.c.h.b16 %v738
        %v980 = vunpack.c.l.b16 %v739
        %v981 = vunpack.c.h.b16 %v739
        %v982 = vunpack.c.l.b16 %v740
        %v983 = vunpack.c.h.b16 %v740
        %v984 = vunpack.c.l.b16 %v741
        %v985 = vunpack.c.h.b16 %v741
        %v986 = vunpack.c.l.b16 %v742
        %v987 = vunpack.c.h.b16 %v742
        %v988 = vunpack.c.l.b16 %v743
        %v989 = vunpack.c.h.b16 %v743
        %v990 = vunpack.c.l.b16 %v744
        %v991 = vunpack.c.h.b16 %v744
        %v992 = vunpack.c.l.b16 %v745
        %v993 = vunpack.c.h.b16 %v745
        %v994 = vunpack.c.l.b16 %v746
        %v995 = vunpack.c.h.b16 %v746
        %v996 = vunpack.c.l.b16 %v747
        %v997 = vunpack.c.h.b16 %v747
        %v998 = vunpack.c.l.b16 %v748
        %v999 = vunpack.c.h.b16 %v748
        %v1000 = vunpack.c.l.b16 %v749
        %v1001 = vunpack.c.h.b16 %v749
        %v1002 = vunpack.c.l.b16 %v750
        %v1003 = vunpack.c.h.b16 %v750
        %v1004 = vunpack.c.l.b16 %v751
        %v1005 = vunpack.c.h.b16 %v751
        %v1006 = vunpack.c.l.b16 %v752
        %v1007 = vunpack.c.h.b16 %v752
        %v1008 = vunpack.c.l.b16 %v753
        %v1009 = vunpack.c.h.b16 %v753
        %v1010 = vpack.c.b16 %v886, %v882
        %v1011 = vpack.c.b16 %v887, %v883
        %v1012 = vpack.c.b16 %v888, %v884
        %v1013 = vpack.c.b16 %v889, %v885
        %v1014 = vpack.c.b16 %v894, %v890
        %v1015 = vpack.c.b16 %v895, %v891
        %v1016 = vpack.c.b16 %v896, %v892
        %v1017 = vpack.c.b16 %v897, %v893
        %v1018 = vpack.c.b16 %v902, %v898
        %v1019 = vpack.c.b16 %v903, %v899
        %v1020 = vpack.c.b16 %v904, %v900
        %v1021 = vpack.c.b16 %v905, %v901
        %v1022 = vpack.c.b16 %v910, %v906
        %v1023 = vpack.c.b16 %v911, %v907
        %v1024 = vpack.c.b16 %v912, %v908
        %v1025 = vpack.c.b16 %v913, %v909
        %v1026 = vpack.c.b16 %v918, %v914
        %v1027 = vpack.c.b16 %v919, %v915
        %v1028 = vpack.c.b16 %v920, %v916
        %v1029 = vpack.c.b16 %v921, %v917
        %v1030 = vpack.c.b16 %v926, %v922
        %v1031 = vpack.c.b16 %v927, %v923
        %v1032 = vpack.c.b16 %v928, %v924
        %v1033 = vpack.c.b16 %v929, %v925
        %v1034 = vpack.c.b16 %v934, %v930
        %v1035 = vpack.c.b16 %v935, %v931
        %v1036 = vpack.c.b16 %v936, %v932
        %v1037 = vpack.c.b16 %v937, %v933
        %v1038 = vpack.c.b16 %v942, %v938
        %v1039 = vpack.c.b16 %v943, %v939
        %v1040 = vpack.c.b16 %v944, %v940
        %v1041 = vpack.c.b16 %v945, %v941
        %v1042 = vpack.c.b16 %v950, %v946
        %v1043 = vpack.c.b16 %v951, %v947
        %v1044 = vpack.c.b16 %v952, %v948
        %v1045 = vpack.c.b16 %v953, %v949
        %v1046 = vpack.c.b16 %v958, %v954
        %v1047 = vpack.c.b16 %v959, %v955
        %v1048 = vpack.c.b16 %v960, %v956
        %v1049 = vpack.c.b16 %v961, %v957
        %v1050 = vpack.c.b16 %v966, %v962
        %v1051 = vpack.c.b16 %v967, %v963
        %v1052 = vpack.c.b16 %v968, %v964
        %v1053 = vpack.c.b16 %v969, %v965
        %v1054 = vpack.c.b16 %v974, %v970
        %v1055 = vpack.c.b16 %v975, %v971
        %v1056 = vpack.c.b16 %v976, %v972
        %v1057 = vpack.c.b16 %v977, %v973
        %v1058 = vpack.c.b16 %v982, %v978
        %v1059 = vpack.c.b16 %v983, %v979
        %v1060 = vpack.c.b16 %v984, %v980
        %v1061 = vpack.c.b16 %v985, %v981
        %v1062 = vpack.c.b16 %v990, %v986
        %v1063 = vpack.c.b16 %v991, %v987
        %v1064 = vpack.c.b16 %v992, %v988
        %v1065 = vpack.c.b16 %v993, %v989
        %v1066 = vpack.c.b16 %v998, %v994
        %v1067 = vpack.c.b16 %v999, %v995
        %v1068 = vpack.c.b16 %v1000, %v996
        %v1069 = vpack.c.b16 %v1001, %v997
        %v1070 = vpack.c.b16 %v1006, %v1002
        %v1071 = vpack.c.b16 %v1007, %v1003
        %v1072 = vpack.c.b16 %v1008, %v1004
        %v1073 = vpack.c.b16 %v1009, %v1005
        %v1202 = vunpack.c.l.b16 %v754
        %v1203 = vunpack.c.h.b16 %v754
        %v1204 = vunpack.c.l.b16 %v755
        %v1205 = vunpack.c.h.b16 %v755
        %v1206 = vunpack.c.l.b16 %v756
        %v1207 = vunpack.c.h.b16 %v756
        %v1208 = vunpack.c.l.b16 %v757
        %v1209 = vunpack.c.h.b16 %v757
        %v1210 = vunpack.c.l.b16 %v758
        %v1211 = vunpack.c.h.b16 %v758
        %v1212 = vunpack.c.l.b16 %v759
        %v1213 = vunpack.c.h.b16 %v759
        %v1214 = vunpack.c.l.b16 %v760
        %v1215 = vunpack.c.h.b16 %v760
        %v1216 = vunpack.c.l.b16 %v761
        %v1217 = vunpack.c.h.b16 %v761
        %v1218 = vunpack.c.l.b16 %v762
        %v1219 = vunpack.c.h.b16 %v762
        %v1220 = vunpack.c.l.b16 %v763
        %v1221 = vunpack.c.h.b16 %v763
        %v1222 = vunpack.c.l.b16 %v764
        %v1223 = vunpack.c.h.b16 %v764
        %v1224 = vunpack.c.l.b16 %v765
        %v1225 = vunpack.c.h.b16 %v765
        %v1226 = vunpack.c.l.b16 %v766
        %v1227 = vunpack.c.h.b16 %v766
        %v1228 = vunpack.c.l.b16 %v767
        %v1229 = vunpack.c.h.b16 %v767
        %v1230 = vunpack.c.l.b16 %v768
        %v1231 = vunpack.c.h.b16 %v768
        %v1232 = vunpack.c.l.b16 %v769
        %v1233 = vunpack.c.h.b16 %v769
        %v1234 = vunpack.c.l.b16 %v770
        %v1235 = vunpack.c.h.b16 %v770
        %v1236 = vunpack.c.l.b16 %v771
        %v1237 = vunpack.c.h.b16 %v771
        %v1238 = vunpack.c.l.b16 %v772
        %v1239 = vunpack.c.h.b16 %v772
        %v1240 = vunpack.c.l.b16 %v773
        %v1241 = vunpack.c.h.b16 %v773
        %v1242 = vunpack.c.l.b16 %v774
        %v1243 = vunpack.c.h.b16 %v774
        %v1244 = vunpack.c.l.b16 %v775
        %v1245 = vunpack.c.h.b16 %v775
        %v1246 = vunpack.c.l.b16 %v776
        %v1247 = vunpack.c.h.b16 %v776
        %v1248 = vunpack.c.l.b16 %v777
        %v1249 = vunpack.c.h.b16 %v777
        %v1250 = vunpack.c.l.b16 %v778
        %v1251 = vunpack.c.h.b16 %v778
        %v1252 = vunpack.c.l.b16 %v779
        %v1253 = vunpack.c.h.b16 %v779
        %v1254 = vunpack.c.l.b16 %v780
        %v1255 = vunpack.c.h.b16 %v780
        %v1256 = vunpack.c.l.b16 %v781
        %v1257 = vunpack.c.h.b16 %v781
        %v1258 = vunpack.c.l.b16 %v782
        %v1259 = vunpack.c.h.b16 %v782
        %v1260 = vunpack.c.l.b16 %v783
        %v1261 = vunpack.c.h.b16 %v783
        %v1262 = vunpack.c.l.b16 %v784
        %v1263 = vunpack.c.h.b16 %v784
        %v1264 = vunpack.c.l.b16 %v785
        %v1265 = vunpack.c.h.b16 %v785
        %v1266 = vunpack.c.l.b16 %v786
        %v1267 = vunpack.c.h.b16 %v786
        %v1268 = vunpack.c.l.b16 %v787
        %v1269 = vunpack.c.h.b16 %v787
        %v1270 = vunpack.c.l.b16 %v788
        %v1271 = vunpack.c.h.b16 %v788
        %v1272 = vunpack.c.l.b16 %v789
        %v1273 = vunpack.c.h.b16 %v789
        %v1274 = vunpack.c.l.b16 %v790
        %v1275 = vunpack.c.h.b16 %v790
        %v1276 = vunpack.c.l.b16 %v791
        %v1277 = vunpack.c.h.b16 %v791
        %v1278 = vunpack.c.l.b16 %v792
        %v1279 = vunpack.c.h.b16 %v792
        %v1280 = vunpack.c.l.b16 %v793
        %v1281 = vunpack.c.h.b16 %v793
        %v1282 = vunpack.c.l.b16 %v794
        %v1283 = vunpack.c.h.b16 %v794
        %v1284 = vunpack.c.l.b16 %v795
        %v1285 = vunpack.c.h.b16 %v795
        %v1286 = vunpack.c.l.b16 %v796
        %v1287 = vunpack.c.h.b16 %v796
        %v1288 = vunpack.c.l.b16 %v797
        %v1289 = vunpack.c.h.b16 %v797
        %v1290 = vunpack.c.l.b16 %v798
        %v1291 = vunpack.c.h.b16 %v798
        %v1292 = vunpack.c.l.b16 %v799
        %v1293 = vunpack.c.h.b16 %v799
        %v1294 = vunpack.c.l.b16 %v800
        %v1295 = vunpack.c.h.b16 %v800
        %v1296 = vunpack.c.l.b16 %v801
        %v1297 = vunpack.c.h.b16 %v801
        %v1298 = vunpack.c.l.b16 %v802
        %v1299 = vunpack.c.h.b16 %v802
        %v1300 = vunpack.c.l.b16 %v803
        %v1301 = vunpack.c.h.b16 %v803
        %v1302 = vunpack.c.l.b16 %v804
        %v1303 = vunpack.c.h.b16 %v804
        %v1304 = vunpack.c.l.b16 %v805
        %v1305 = vunpack.c.h.b16 %v805
        %v1306 = vunpack.c.l.b16 %v806
        %v1307 = vunpack.c.h.b16 %v806
        %v1308 = vunpack.c.l.b16 %v807
        %v1309 = vunpack.c.h.b16 %v807
        %v1310 = vunpack.c.l.b16 %v808
        %v1311 = vunpack.c.h.b16 %v808
        %v1312 = vunpack.c.l.b16 %v809
        %v1313 = vunpack.c.h.b16 %v809
        %v1314 = vunpack.c.l.b16 %v810
        %v1315 = vunpack.c.h.b16 %v810
        %v1316 = vunpack.c.l.b16 %v811
        %v1317 = vunpack.c.h.b16 %v811
        %v1318 = vunpack.c.l.b16 %v812
        %v1319 = vunpack.c.h.b16 %v812
        %v1320 = vunpack.c.l.b16 %v813
        %v1321 = vunpack.c.h.b16 %v813
        %v1322 = vunpack.c.l.b16 %v814
        %v1323 = vunpack.c.h.b16 %v814
        %v1324 = vunpack.c.l.b16 %v815
        %v1325 = vunpack.c.h.b16 %v815
        %v1326 = vunpack.c.l.b16 %v816
        %v1327 = vunpack.c.h.b16 %v816
        %v1328 = vunpack.c.l.b16 %v817
        %v1329 = vunpack.c.h.b16 %v817
        %v1330 = vpack.c.b16 %v1204, %v1202
        %v1331 = vpack.c.b16 %v1205, %v1203
        %v1332 = vpack.c.b16 %v1208, %v1206
        %v1333 = vpack.c.b16 %v1209, %v1207
        %v1334 = vpack.c.b16 %v1212, %v1210
        %v1335 = vpack.c.b16 %v1213, %v1211
        %v1336 = vpack.c.b16 %v1216, %v1214
        %v1337 = vpack.c.b16 %v1217, %v1215
        %v1338 = vpack.c.b16 %v1220, %v1218
        %v1339 = vpack.c.b16 %v1221, %v1219
        %v1340 = vpack.c.b16 %v1224, %v1222
        %v1341 = vpack.c.b16 %v1225, %v1223
        %v1342 = vpack.c.b16 %v1228, %v1226
        %v1343 = vpack.c.b16 %v1229, %v1227
        %v1344 = vpack.c.b16 %v1232, %v1230
        %v1345 = vpack.c.b16 %v1233, %v1231
        %v1346 = vpack.c.b16 %v1236, %v1234
        %v1347 = vpack.c.b16 %v1237, %v1235
        %v1348 = vpack.c.b16 %v1240, %v1238
        %v1349 = vpack.c.b16 %v1241, %v1239
        %v1350 = vpack.c.b16 %v1244, %v1242
        %v1351 = vpack.c.b16 %v1245, %v1243
        %v1352 = vpack.c.b16 %v1248, %v1246
        %v1353 = vpack.c.b16 %v1249, %v1247
        %v1354 = vpack.c.b16 %v1252, %v1250
        %v1355 = vpack.c.b16 %v1253, %v1251
        %v1356 = vpack.c.b16 %v1256, %v1254
        %v1357 = vpack.c.b16 %v1257, %v1255
        %v1358 = vpack.c.b16 %v1260, %v1258
        %v1359 = vpack.c.b16 %v1261, %v1259
        %v1360 = vpack.c.b16 %v1264, %v1262
        %v1361 = vpack.c.b16 %v1265, %v1263
        %v1362 = vpack.c.b16 %v1268, %v1266
        %v1363 = vpack.c.b16 %v1269, %v1267
        %v1364 = vpack.c.b16 %v1272, %v1270
        %v1365 = vpack.c.b16 %v1273, %v1271
        %v1366 = vpack.c.b16 %v1276, %v1274
        %v1367 = vpack.c.b16 %v1277, %v1275
        %v1368 = vpack.c.b16 %v1280, %v1278
        %v1369 = vpack.c.b16 %v1281, %v1279
        %v1370 = vpack.c.b16 %v1284, %v1282
        %v1371 = vpack.c.b16 %v1285, %v1283
        %v1372 = vpack.c.b16 %v1288, %v1286
        %v1373 = vpack.c.b16 %v1289, %v1287
        %v1374 = vpack.c.b16 %v1292, %v1290
        %v1375 = vpack.c.b16 %v1293, %v1291
        %v1376 = vpack.c.b16 %v1296, %v1294
        %v1377 = vpack.c.b16 %v1297, %v1295
        %v1378 = vpack.c.b16 %v1300, %v1298
        %v1379 = vpack.c.b16 %v1301, %v1299
        %v1380 = vpack.c.b16 %v1304, %v1302
        %v1381 = vpack.c.b16 %v1305, %v1303
        %v1382 = vpack.c.b16 %v1308, %v1306
        %v1383 = vpack.c.b16 %v1309, %v1307
        %v1384 = vpack.c.b16 %v1312, %v1310
        %v1385 = vpack.c.b16 %v1313, %v1311
        %v1386 = vpack.c.b16 %v1316, %v1314
        %v1387 = vpack.c.b16 %v1317, %v1315
        %v1388 = vpack.c.b16 %v1320, %v1318
        %v1389 = vpack.c.b16 %v1321, %v1319
        %v1390 = vpack.c.b16 %v1324, %v1322
        %v1391 = vpack.c.b16 %v1325, %v1323
        %v1392 = vpack.c.b16 %v1328, %v1326
        %v1393 = vpack.c.b16 %v1329, %v1327
        %1458 = vmatprep.subr.bf16.mxu0 %v1331
        %1459 = vmatpush1.bf16.msra.mxu0 %v1330
        %1460 = vmatprep.subr.bf16.mxu0 %v1333
        %1461 = vmatpush1.bf16.msra.mxu0 %v1332
        %1462 = vmatprep.subr.bf16.mxu0 %v1335
        %1463 = vmatpush1.bf16.msra.mxu0 %v1334
        %1464 = vmatprep.subr.bf16.mxu0 %v1337
        %1465 = vmatpush1.bf16.msra.mxu0 %v1336
        %1466 = vmatprep.subr.bf16.mxu0 %v1339
        %1467 = vmatpush1.bf16.msra.mxu0 %v1338
        %1468 = vmatprep.subr.bf16.mxu0 %v1341
        %1469 = vmatpush1.bf16.msra.mxu0 %v1340
        %1470 = vmatprep.subr.bf16.mxu0 %v1343
        %1471 = vmatpush1.bf16.msra.mxu0 %v1342
        %1472 = vmatprep.subr.bf16.mxu0 %v1345
        %1473 = vmatpush1.bf16.msra.mxu0 %v1344
        %1474 = vmatprep.subr.bf16.mxu0 %v1347
        %1475 = vmatpush1.bf16.msra.mxu0 %v1346
        %1476 = vmatprep.subr.bf16.mxu0 %v1349
        %1477 = vmatpush1.bf16.msra.mxu0 %v1348
        %1478 = vmatprep.subr.bf16.mxu0 %v1351
        %1479 = vmatpush1.bf16.msra.mxu0 %v1350
        %1480 = vmatprep.subr.bf16.mxu0 %v1353
        %1481 = vmatpush1.bf16.msra.mxu0 %v1352
        %1482 = vmatprep.subr.bf16.mxu0 %v1355
        %1483 = vmatpush1.bf16.msra.mxu0 %v1354
        %1484 = vmatprep.subr.bf16.mxu0 %v1357
        %1485 = vmatpush1.bf16.msra.mxu0 %v1356
        %1486 = vmatprep.subr.bf16.mxu0 %v1359
        %1487 = vmatpush1.bf16.msra.mxu0 %v1358
        %1488 = vmatprep.subr.bf16.mxu0 %v1361
        %1489 = vmatpush1.bf16.msra.mxu0 %v1360
        %1490 = vmatprep.mubr.bf16.mxu0 %v1011
        %1491 = vmatmul.mubr.bf16.gmra.mrb[0].mxu0 %v1010
        %v1492 = vpop.f32.mrb[0].mxu0
        %v1493 = vadd.f32 0.0, %v1492
        %v1494 = vpop.f32.mrb[0].mxu0
        %v1495 = vadd.f32 0.0, %v1494
        %v1496 = vpop.f32.mrb[0].mxu0
        %v1497 = vadd.f32 0.0, %v1496
        %v1498 = vpop.f32.mrb[0].mxu0
        %v1499 = vadd.f32 0.0, %v1498
        %1500 = vmatprep.mubr.bf16.mxu0 %v1015
        %1501 = vmatmul.mubr.bf16.gmra.mrb[0].mxu0 %v1014
        %v1502 = vpop.f32.mrb[0].mxu0
        %v1503 = vadd.f32 0.0, %v1502
        %v1504 = vpop.f32.mrb[0].mxu0
        %v1505 = vadd.f32 0.0, %v1504
        %v1506 = vpop.f32.mrb[0].mxu0
        %v1507 = vadd.f32 0.0, %v1506
        %v1508 = vpop.f32.mrb[0].mxu0
        %v1509 = vadd.f32 0.0, %v1508
        %1510 = vmatprep.mubr.bf16.mxu0 %v1019
        %1511 = vmatmul.mubr.bf16.gmra.mrb[0].mxu0 %v1018
        %v1512 = vpop.f32.mrb[0].mxu0
        %v1513 = vadd.f32 0.0, %v1512
        %v1514 = vpop.f32.mrb[0].mxu0
        %v1515 = vadd.f32 0.0, %v1514
        %v1516 = vpop.f32.mrb[0].mxu0
        %v1517 = vadd.f32 0.0, %v1516
        %v1518 = vpop.f32.mrb[0].mxu0
        %v1519 = vadd.f32 0.0, %v1518
        %1520 = vmatprep.mubr.bf16.mxu0 %v1023
        %1521 = vmatmul.mubr.bf16.gmra.mrb[0].mxu0 %v1022
        %v1522 = vpop.f32.mrb[0].mxu0
        %v1523 = vadd.f32 0.0, %v1522
        %v1524 = vpop.f32.mrb[0].mxu0
        %v1525 = vadd.f32 0.0, %v1524
        %v1526 = vpop.f32.mrb[0].mxu0
        %v1527 = vadd.f32 0.0, %v1526
        %v1528 = vpop.f32.mrb[0].mxu0
        %v1529 = vadd.f32 0.0, %v1528
        %1530 = vmatprep.mubr.bf16.mxu0 %v1027
        %1531 = vmatmul.mubr.bf16.gmra.mrb[0].mxu0 %v1026
        %v1532 = vpop.f32.mrb[0].mxu0
        %v1533 = vadd.f32 0.0, %v1532
        %v1534 = vpop.f32.mrb[0].mxu0
        %v1535 = vadd.f32 0.0, %v1534
        %v1536 = vpop.f32.mrb[0].mxu0
        %v1537 = vadd.f32 0.0, %v1536
        %v1538 = vpop.f32.mrb[0].mxu0
        %v1539 = vadd.f32 0.0, %v1538
        %1540 = vmatprep.mubr.bf16.mxu0 %v1031
        %1541 = vmatmul.mubr.bf16.gmra.mrb[0].mxu0 %v1030
        %v1542 = vpop.f32.mrb[0].mxu0
        %v1543 = vadd.f32 0.0, %v1542
        %v1544 = vpop.f32.mrb[0].mxu0
        %v1545 = vadd.f32 0.0, %v1544
        %v1546 = vpop.f32.mrb[0].mxu0
        %v1547 = vadd.f32 0.0, %v1546
        %v1548 = vpop.f32.mrb[0].mxu0
        %v1549 = vadd.f32 0.0, %v1548
        %1550 = vmatprep.mubr.bf16.mxu0 %v1035
        %1551 = vmatmul.mubr.bf16.gmra.mrb[0].mxu0 %v1034
        %v1552 = vpop.f32.mrb[0].mxu0
        %v1553 = vadd.f32 0.0, %v1552
        %v1554 = vpop.f32.mrb[0].mxu0
        %v1555 = vadd.f32 0.0, %v1554
        %v1556 = vpop.f32.mrb[0].mxu0
        %v1557 = vadd.f32 0.0, %v1556
        %v1558 = vpop.f32.mrb[0].mxu0
        %v1559 = vadd.f32 0.0, %v1558
        %1560 = vmatprep.mubr.bf16.mxu0 %v1039
        %1561 = vmatmul.mubr.bf16.gmra.mrb[0].mxu0 %v1038
        %v1562 = vpop.f32.mrb[0].mxu0
        %v1563 = vadd.f32 0.0, %v1562
        %v1564 = vpop.f32.mrb[0].mxu0
        %v1565 = vadd.f32 0.0, %v1564
        %v1566 = vpop.f32.mrb[0].mxu0
        %v1567 = vadd.f32 0.0, %v1566
        %v1568 = vpop.f32.mrb[0].mxu0
        %v1569 = vadd.f32 0.0, %v1568
        %1570 = vmatprep.mubr.bf16.mxu0 %v1043
        %1571 = vmatmul.mubr.bf16.gmra.mrb[0].mxu0 %v1042
        %v1572 = vpop.f32.mrb[0].mxu0
        %v1573 = vadd.f32 0.0, %v1572
        %v1574 = vpop.f32.mrb[0].mxu0
        %v1575 = vadd.f32 0.0, %v1574
        %v1576 = vpop.f32.mrb[0].mxu0
        %v1577 = vadd.f32 0.0, %v1576
        %v1578 = vpop.f32.mrb[0].mxu0
        %v1579 = vadd.f32 0.0, %v1578
        %1580 = vmatprep.mubr.bf16.mxu0 %v1047
        %1581 = vmatmul.mubr.bf16.gmra.mrb[0].mxu0 %v1046
        %v1582 = vpop.f32.mrb[0].mxu0
        %v1583 = vadd.f32 0.0, %v1582
        %v1584 = vpop.f32.mrb[0].mxu0
        %v1585 = vadd.f32 0.0, %v1584
        %v1586 = vpop.f32.mrb[0].mxu0
        %v1587 = vadd.f32 0.0, %v1586
        %v1588 = vpop.f32.mrb[0].mxu0
        %v1589 = vadd.f32 0.0, %v1588
        %1590 = vmatprep.mubr.bf16.mxu0 %v1051
        %1591 = vmatmul.mubr.bf16.gmra.mrb[0].mxu0 %v1050
        %v1592 = vpop.f32.mrb[0].mxu0
        %v1593 = vadd.f32 0.0, %v1592
        %v1594 = vpop.f32.mrb[0].mxu0
        %v1595 = vadd.f32 0.0, %v1594
        %v1596 = vpop.f32.mrb[0].mxu0
        %v1597 = vadd.f32 0.0, %v1596
        %v1598 = vpop.f32.mrb[0].mxu0
        %v1599 = vadd.f32 0.0, %v1598
        %1600 = vmatprep.mubr.bf16.mxu0 %v1055
        %1601 = vmatmul.mubr.bf16.gmra.mrb[0].mxu0 %v1054
        %v1602 = vpop.f32.mrb[0].mxu0
        %v1603 = vadd.f32 0.0, %v1602
        %v1604 = vpop.f32.mrb[0].mxu0
        %v1605 = vadd.f32 0.0, %v1604
        %v1606 = vpop.f32.mrb[0].mxu0
        %v1607 = vadd.f32 0.0, %v1606
        %v1608 = vpop.f32.mrb[0].mxu0
        %v1609 = vadd.f32 0.0, %v1608
        %1610 = vmatprep.mubr.bf16.mxu0 %v1059
        %1611 = vmatmul.mubr.bf16.gmra.mrb[0].mxu0 %v1058
        %v1612 = vpop.f32.mrb[0].mxu0
        %v1613 = vadd.f32 0.0, %v1612
        %v1614 = vpop.f32.mrb[0].mxu0
        %v1615 = vadd.f32 0.0, %v1614
        %v1616 = vpop.f32.mrb[0].mxu0
        %v1617 = vadd.f32 0.0, %v1616
        %v1618 = vpop.f32.mrb[0].mxu0
        %v1619 = vadd.f32 0.0, %v1618
        %1620 = vmatprep.mubr.bf16.mxu0 %v1063
        %1621 = vmatmul.mubr.bf16.gmra.mrb[0].mxu0 %v1062
        %v1622 = vpop.f32.mrb[0].mxu0
        %v1623 = vadd.f32 0.0, %v1622
        %v1624 = vpop.f32.mrb[0].mxu0
        %v1625 = vadd.f32 0.0, %v1624
        %v1626 = vpop.f32.mrb[0].mxu0
        %v1627 = vadd.f32 0.0, %v1626
        %v1628 = vpop.f32.mrb[0].mxu0
        %v1629 = vadd.f32 0.0, %v1628
        %1630 = vmatprep.mubr.bf16.mxu0 %v1067
        %1631 = vmatmul.mubr.bf16.gmra.mrb[0].mxu0 %v1066
        %v1632 = vpop.f32.mrb[0].mxu0
        %v1633 = vadd.f32 0.0, %v1632
        %v1634 = vpop.f32.mrb[0].mxu0
        %v1635 = vadd.f32 0.0, %v1634
        %v1636 = vpop.f32.mrb[0].mxu0
        %v1637 = vadd.f32 0.0, %v1636
        %v1638 = vpop.f32.mrb[0].mxu0
        %v1639 = vadd.f32 0.0, %v1638
        %1640 = vmatprep.mubr.bf16.mxu0 %v1071
        %1641 = vmatmul.mubr.bf16.gmra.mrb[0].mxu0 %v1070
        %v1642 = vpop.f32.mrb[0].mxu0
        %v1643 = vadd.f32 0.0, %v1642
        %v1644 = vpop.f32.mrb[0].mxu0
        %v1645 = vadd.f32 0.0, %v1644
        %v1646 = vpop.f32.mrb[0].mxu0
        %v1647 = vadd.f32 0.0, %v1646
        %v1648 = vpop.f32.mrb[0].mxu0
        %v1649 = vadd.f32 0.0, %v1648
        %1650 = vdwg.mxu0
        %1651 = vmatprep.subr.bf16.mxu0 %v1363
        %1652 = vmatpush1.bf16.msra.mxu0 %v1362
        %1653 = vmatprep.subr.bf16.mxu0 %v1365
        %1654 = vmatpush1.bf16.msra.mxu0 %v1364
        %1655 = vmatprep.subr.bf16.mxu0 %v1367
        %1656 = vmatpush1.bf16.msra.mxu0 %v1366
        %1657 = vmatprep.subr.bf16.mxu0 %v1369
        %1658 = vmatpush1.bf16.msra.mxu0 %v1368
        %1659 = vmatprep.subr.bf16.mxu0 %v1371
        %1660 = vmatpush1.bf16.msra.mxu0 %v1370
        %1661 = vmatprep.subr.bf16.mxu0 %v1373
        %1662 = vmatpush1.bf16.msra.mxu0 %v1372
        %1663 = vmatprep.subr.bf16.mxu0 %v1375
        %1664 = vmatpush1.bf16.msra.mxu0 %v1374
        %1665 = vmatprep.subr.bf16.mxu0 %v1377
        %1666 = vmatpush1.bf16.msra.mxu0 %v1376
        %1667 = vmatprep.subr.bf16.mxu0 %v1379
        %1668 = vmatpush1.bf16.msra.mxu0 %v1378
        %1669 = vmatprep.subr.bf16.mxu0 %v1381
        %1670 = vmatpush1.bf16.msra.mxu0 %v1380
        %1671 = vmatprep.subr.bf16.mxu0 %v1383
        %1672 = vmatpush1.bf16.msra.mxu0 %v1382
        %1673 = vmatprep.subr.bf16.mxu0 %v1385
        %1674 = vmatpush1.bf16.msra.mxu0 %v1384
        %1675 = vmatprep.subr.bf16.mxu0 %v1387
        %1676 = vmatpush1.bf16.msra.mxu0 %v1386
        %1677 = vmatprep.subr.bf16.mxu0 %v1389
        %1678 = vmatpush1.bf16.msra.mxu0 %v1388
        %1679 = vmatprep.subr.bf16.mxu0 %v1391
        %1680 = vmatpush1.bf16.msra.mxu0 %v1390
        %1681 = vmatprep.subr.bf16.mxu0 %v1393
        %1682 = vmatpush1.bf16.msra.mxu0 %v1392
        %1683 = vmatprep.mubr.bf16.mxu0 %v1013
        %1684 = vmatmul.mubr.bf16.gmra.mrb[0].mxu0 %v1012
        %v1685 = vpop.f32.mrb[0].mxu0
        %v1686 = vadd.f32 %v1493, %v1685
        %v1687 = vpop.f32.mrb[0].mxu0
        %v1688 = vadd.f32 %v1495, %v1687
        %v1689 = vpop.f32.mrb[0].mxu0
        %v1690 = vadd.f32 %v1497, %v1689
        %v1691 = vpop.f32.mrb[0].mxu0
        %v1692 = vadd.f32 %v1499, %v1691
        %1693 = vmatprep.mubr.bf16.mxu0 %v1017
        %1694 = vmatmul.mubr.bf16.gmra.mrb[0].mxu0 %v1016
        %v1695 = vpop.f32.mrb[0].mxu0
        %v1696 = vadd.f32 %v1503, %v1695
        %v1697 = vpop.f32.mrb[0].mxu0
        %v1698 = vadd.f32 %v1505, %v1697
        %v1699 = vpop.f32.mrb[0].mxu0
        %v1700 = vadd.f32 %v1507, %v1699
        %v1701 = vpop.f32.mrb[0].mxu0
        %v1702 = vadd.f32 %v1509, %v1701
        %1703 = vmatprep.mubr.bf16.mxu0 %v1021
        %1704 = vmatmul.mubr.bf16.gmra.mrb[0].mxu0 %v1020
        %v1705 = vpop.f32.mrb[0].mxu0
        %v1706 = vadd.f32 %v1513, %v1705
        %v1707 = vpop.f32.mrb[0].mxu0
        %v1708 = vadd.f32 %v1515, %v1707
        %v1709 = vpop.f32.mrb[0].mxu0
        %v1710 = vadd.f32 %v1517, %v1709
        %v1711 = vpop.f32.mrb[0].mxu0
        %v1712 = vadd.f32 %v1519, %v1711
        %1713 = vmatprep.mubr.bf16.mxu0 %v1025
        %1714 = vmatmul.mubr.bf16.gmra.mrb[0].mxu0 %v1024
        %v1715 = vpop.f32.mrb[0].mxu0
        %v1716 = vadd.f32 %v1523, %v1715
        %v1717 = vpop.f32.mrb[0].mxu0
        %v1718 = vadd.f32 %v1525, %v1717
        %v1719 = vpop.f32.mrb[0].mxu0
        %v1720 = vadd.f32 %v1527, %v1719
        %v1721 = vpop.f32.mrb[0].mxu0
        %v1722 = vadd.f32 %v1529, %v1721
        %1723 = vmatprep.mubr.bf16.mxu0 %v1029
        %1724 = vmatmul.mubr.bf16.gmra.mrb[0].mxu0 %v1028
        %v1725 = vpop.f32.mrb[0].mxu0
        %v1726 = vadd.f32 %v1533, %v1725
        %v1727 = vpop.f32.mrb[0].mxu0
        %v1728 = vadd.f32 %v1535, %v1727
        %v1729 = vpop.f32.mrb[0].mxu0
        %v1730 = vadd.f32 %v1537, %v1729
        %v1731 = vpop.f32.mrb[0].mxu0
        %v1732 = vadd.f32 %v1539, %v1731
        %1733 = vmatprep.mubr.bf16.mxu0 %v1033
        %1734 = vmatmul.mubr.bf16.gmra.mrb[0].mxu0 %v1032
        %v1735 = vpop.f32.mrb[0].mxu0
        %v1736 = vadd.f32 %v1543, %v1735
        %v1737 = vpop.f32.mrb[0].mxu0
        %v1738 = vadd.f32 %v1545, %v1737
        %v1739 = vpop.f32.mrb[0].mxu0
        %v1740 = vadd.f32 %v1547, %v1739
        %v1741 = vpop.f32.mrb[0].mxu0
        %v1742 = vadd.f32 %v1549, %v1741
        %1743 = vmatprep.mubr.bf16.mxu0 %v1037
        %1744 = vmatmul.mubr.bf16.gmra.mrb[0].mxu0 %v1036
        %v1745 = vpop.f32.mrb[0].mxu0
        %v1746 = vadd.f32 %v1553, %v1745
        %v1747 = vpop.f32.mrb[0].mxu0
        %v1748 = vadd.f32 %v1555, %v1747
        %v1749 = vpop.f32.mrb[0].mxu0
        %v1750 = vadd.f32 %v1557, %v1749
        %v1751 = vpop.f32.mrb[0].mxu0
        %v1752 = vadd.f32 %v1559, %v1751
        %1753 = vmatprep.mubr.bf16.mxu0 %v1041
        %1754 = vmatmul.mubr.bf16.gmra.mrb[0].mxu0 %v1040
        %v1755 = vpop.f32.mrb[0].mxu0
        %v1756 = vadd.f32 %v1563, %v1755
        %v1757 = vpop.f32.mrb[0].mxu0
        %v1758 = vadd.f32 %v1565, %v1757
        %v1759 = vpop.f32.mrb[0].mxu0
        %v1760 = vadd.f32 %v1567, %v1759
        %v1761 = vpop.f32.mrb[0].mxu0
        %v1762 = vadd.f32 %v1569, %v1761
        %1763 = vmatprep.mubr.bf16.mxu0 %v1045
        %1764 = vmatmul.mubr.bf16.gmra.mrb[0].mxu0 %v1044
        %v1765 = vpop.f32.mrb[0].mxu0
        %v1766 = vadd.f32 %v1573, %v1765
        %v1767 = vpop.f32.mrb[0].mxu0
        %v1768 = vadd.f32 %v1575, %v1767
        %v1769 = vpop.f32.mrb[0].mxu0
        %v1770 = vadd.f32 %v1577, %v1769
        %v1771 = vpop.f32.mrb[0].mxu0
        %v1772 = vadd.f32 %v1579, %v1771
        %1773 = vmatprep.mubr.bf16.mxu0 %v1049
        %1774 = vmatmul.mubr.bf16.gmra.mrb[0].mxu0 %v1048
        %v1775 = vpop.f32.mrb[0].mxu0
        %v1776 = vadd.f32 %v1583, %v1775
        %v1777 = vpop.f32.mrb[0].mxu0
        %v1778 = vadd.f32 %v1585, %v1777
        %v1779 = vpop.f32.mrb[0].mxu0
        %v1780 = vadd.f32 %v1587, %v1779
        %v1781 = vpop.f32.mrb[0].mxu0
        %v1782 = vadd.f32 %v1589, %v1781
        %1783 = vmatprep.mubr.bf16.mxu0 %v1053
        %1784 = vmatmul.mubr.bf16.gmra.mrb[0].mxu0 %v1052
        %v1785 = vpop.f32.mrb[0].mxu0
        %v1786 = vadd.f32 %v1593, %v1785
        %v1787 = vpop.f32.mrb[0].mxu0
        %v1788 = vadd.f32 %v1595, %v1787
        %v1789 = vpop.f32.mrb[0].mxu0
        %v1790 = vadd.f32 %v1597, %v1789
        %v1791 = vpop.f32.mrb[0].mxu0
        %v1792 = vadd.f32 %v1599, %v1791
        %1793 = vmatprep.mubr.bf16.mxu0 %v1057
        %1794 = vmatmul.mubr.bf16.gmra.mrb[0].mxu0 %v1056
        %v1795 = vpop.f32.mrb[0].mxu0
        %v1796 = vadd.f32 %v1603, %v1795
        %v1797 = vpop.f32.mrb[0].mxu0
        %v1798 = vadd.f32 %v1605, %v1797
        %v1799 = vpop.f32.mrb[0].mxu0
        %v1800 = vadd.f32 %v1607, %v1799
        %v1801 = vpop.f32.mrb[0].mxu0
        %v1802 = vadd.f32 %v1609, %v1801
        %1803 = vmatprep.mubr.bf16.mxu0 %v1061
        %1804 = vmatmul.mubr.bf16.gmra.mrb[0].mxu0 %v1060
        %v1805 = vpop.f32.mrb[0].mxu0
        %v1806 = vadd.f32 %v1613, %v1805
        %v1807 = vpop.f32.mrb[0].mxu0
        %v1808 = vadd.f32 %v1615, %v1807
        %v1809 = vpop.f32.mrb[0].mxu0
        %v1810 = vadd.f32 %v1617, %v1809
        %v1811 = vpop.f32.mrb[0].mxu0
        %v1812 = vadd.f32 %v1619, %v1811
        %1813 = vmatprep.mubr.bf16.mxu0 %v1065
        %1814 = vmatmul.mubr.bf16.gmra.mrb[0].mxu0 %v1064
        %v1815 = vpop.f32.mrb[0].mxu0
        %v1816 = vadd.f32 %v1623, %v1815
        %v1817 = vpop.f32.mrb[0].mxu0
        %v1818 = vadd.f32 %v1625, %v1817
        %v1819 = vpop.f32.mrb[0].mxu0
        %v1820 = vadd.f32 %v1627, %v1819
        %v1821 = vpop.f32.mrb[0].mxu0
        %v1822 = vadd.f32 %v1629, %v1821
        %1823 = vmatprep.mubr.bf16.mxu0 %v1069
        %1824 = vmatmul.mubr.bf16.gmra.mrb[0].mxu0 %v1068
        %v1825 = vpop.f32.mrb[0].mxu0
        %v1826 = vadd.f32 %v1633, %v1825
        %v1827 = vpop.f32.mrb[0].mxu0
        %v1828 = vadd.f32 %v1635, %v1827
        %v1829 = vpop.f32.mrb[0].mxu0
        %v1830 = vadd.f32 %v1637, %v1829
        %v1831 = vpop.f32.mrb[0].mxu0
        %v1832 = vadd.f32 %v1639, %v1831
        %1833 = vmatprep.mubr.bf16.mxu0 %v1073
        %1834 = vmatmul.mubr.bf16.gmra.mrb[0].mxu0 %v1072
        %v1835 = vpop.f32.mrb[0].mxu0
        %v1836 = vadd.f32 %v1643, %v1835
        %v1837 = vpop.f32.mrb[0].mxu0
        %v1838 = vadd.f32 %v1645, %v1837
        %v1839 = vpop.f32.mrb[0].mxu0
        %v1840 = vadd.f32 %v1647, %v1839
        %v1841 = vpop.f32.mrb[0].mxu0
        %v1842 = vadd.f32 %v1649, %v1841
        %1843 = vdwg.mxu0
        %v1844 = vadd.f32 %v626, %v1686
        %v1845 = vadd.f32 %v627, %v1688
        %v1846 = vadd.f32 %v628, %v1690
        %v1847 = vadd.f32 %v629, %v1692
        %v1848 = vadd.f32 %v630, %v1696
        %v1849 = vadd.f32 %v631, %v1698
        %v1850 = vadd.f32 %v632, %v1700
        %v1851 = vadd.f32 %v633, %v1702
        %v1852 = vadd.f32 %v634, %v1706
        %v1853 = vadd.f32 %v635, %v1708
        %v1854 = vadd.f32 %v636, %v1710
        %v1855 = vadd.f32 %v637, %v1712
        %v1856 = vadd.f32 %v638, %v1716
        %v1857 = vadd.f32 %v639, %v1718
        %v1858 = vadd.f32 %v640, %v1720
        %v1859 = vadd.f32 %v641, %v1722
        %v1860 = vadd.f32 %v642, %v1726
        %v1861 = vadd.f32 %v643, %v1728
        %v1862 = vadd.f32 %v644, %v1730
        %v1863 = vadd.f32 %v645, %v1732
        %v1864 = vadd.f32 %v646, %v1736
        %v1865 = vadd.f32 %v647, %v1738
        %v1866 = vadd.f32 %v648, %v1740
        %v1867 = vadd.f32 %v649, %v1742
        %v1868 = vadd.f32 %v650, %v1746
        %v1869 = vadd.f32 %v651, %v1748
        %v1870 = vadd.f32 %v652, %v1750
        %v1871 = vadd.f32 %v653, %v1752
        %v1872 = vadd.f32 %v654, %v1756
        %v1873 = vadd.f32 %v655, %v1758
        %v1874 = vadd.f32 %v656, %v1760
        %v1875 = vadd.f32 %v657, %v1762
        %v1876 = vadd.f32 %v658, %v1766
        %v1877 = vadd.f32 %v659, %v1768
        %v1878 = vadd.f32 %v660, %v1770
        %v1879 = vadd.f32 %v661, %v1772
        %v1880 = vadd.f32 %v662, %v1776
        %v1881 = vadd.f32 %v663, %v1778
        %v1882 = vadd.f32 %v664, %v1780
        %v1883 = vadd.f32 %v665, %v1782
        %v1884 = vadd.f32 %v666, %v1786
        %v1885 = vadd.f32 %v667, %v1788
        %v1886 = vadd.f32 %v668, %v1790
        %v1887 = vadd.f32 %v669, %v1792
        %v1888 = vadd.f32 %v670, %v1796
        %v1889 = vadd.f32 %v671, %v1798
        %v1890 = vadd.f32 %v672, %v1800
        %v1891 = vadd.f32 %v673, %v1802
        %v1892 = vadd.f32 %v674, %v1806
        %v1893 = vadd.f32 %v675, %v1808
        %v1894 = vadd.f32 %v676, %v1810
        %v1895 = vadd.f32 %v677, %v1812
        %v1896 = vadd.f32 %v678, %v1816
        %v1897 = vadd.f32 %v679, %v1818
        %v1898 = vadd.f32 %v680, %v1820
        %v1899 = vadd.f32 %v681, %v1822
        %v1900 = vadd.f32 %v682, %v1826
        %v1901 = vadd.f32 %v683, %v1828
        %v1902 = vadd.f32 %v684, %v1830
        %v1903 = vadd.f32 %v685, %v1832
        %v1904 = vadd.f32 %v686, %v1836
        %v1905 = vadd.f32 %v687, %v1838
        %v1906 = vadd.f32 %v688, %v1840
        %v1907 = vadd.f32 %v689, %v1842
        %1908 = vst [vmem:[%s524] sm:$0xff] %v1844
        %1909 = vst [vmem:[%s524 + $0x8] sm:$0xff] %v1845
        %1910 = vst [vmem:[%s524 + $0x10] sm:$0xff] %v1846
        %1911 = vst [vmem:[%s524 + $0x18] sm:$0xff] %v1847
        %1912 = vst [vmem:[%s524 + $0x20] sm:$0xff] %v1848
        %1913 = vst [vmem:[%s524 + $0x28] sm:$0xff] %v1849
        %1914 = vst [vmem:[%s524 + $0x30] sm:$0xff] %v1850
        %1915 = vst [vmem:[%s524 + $0x38] sm:$0xff] %v1851
        %1916 = vst [vmem:[%s524 + $0x40] sm:$0xff] %v1852
        %1917 = vst [vmem:[%s524 + $0x48] sm:$0xff] %v1853
        %1918 = vst [vmem:[%s524 + $0x50] sm:$0xff] %v1854
        %1919 = vst [vmem:[%s524 + $0x58] sm:$0xff] %v1855
        %1920 = vst [vmem:[%s524 + $0x60] sm:$0xff] %v1856
        %1921 = vst [vmem:[%s524 + $0x68] sm:$0xff] %v1857
        %1922 = vst [vmem:[%s524 + $0x70] sm:$0xff] %v1858
        %1923 = vst [vmem:[%s524 + $0x78] sm:$0xff] %v1859
        %1924 = vst [vmem:[%s524 + $0x80] sm:$0xff] %v1860
        %1925 = vst [vmem:[%s524 + $0x88] sm:$0xff] %v1861
        %1926 = vst [vmem:[%s524 + $0x90] sm:$0xff] %v1862
        %1927 = vst [vmem:[%s524 + $0x98] sm:$0xff] %v1863
        %1928 = vst [vmem:[%s524 + $0xa0] sm:$0xff] %v1864
        %1929 = vst [vmem:[%s524 + $0xa8] sm:$0xff] %v1865
        %1930 = vst [vmem:[%s524 + $0xb0] sm:$0xff] %v1866
        %1931 = vst [vmem:[%s524 + $0xb8] sm:$0xff] %v1867
        %1932 = vst [vmem:[%s524 + $0xc0] sm:$0xff] %v1868
        %1933 = vst [vmem:[%s524 + $0xc8] sm:$0xff] %v1869
        %1934 = vst [vmem:[%s524 + $0xd0] sm:$0xff] %v1870
        %1935 = vst [vmem:[%s524 + $0xd8] sm:$0xff] %v1871
        %1936 = vst [vmem:[%s524 + $0xe0] sm:$0xff] %v1872
        %1937 = vst [vmem:[%s524 + $0xe8] sm:$0xff] %v1873
        %1938 = vst [vmem:[%s524 + $0xf0] sm:$0xff] %v1874
        %1939 = vst [vmem:[%s524 + $0xf8] sm:$0xff] %v1875
        %1940 = vst [vmem:[%s524 + $0x100] sm:$0xff] %v1876
        %1941 = vst [vmem:[%s524 + $0x108] sm:$0xff] %v1877
        %1942 = vst [vmem:[%s524 + $0x110] sm:$0xff] %v1878
        %1943 = vst [vmem:[%s524 + $0x118] sm:$0xff] %v1879
        %1944 = vst [vmem:[%s524 + $0x120] sm:$0xff] %v1880
        %1945 = vst [vmem:[%s524 + $0x128] sm:$0xff] %v1881
        %1946 = vst [vmem:[%s524 + $0x130] sm:$0xff] %v1882
        %1947 = vst [vmem:[%s524 + $0x138] sm:$0xff] %v1883
        %1948 = vst [vmem:[%s524 + $0x140] sm:$0xff] %v1884
        %1949 = vst [vmem:[%s524 + $0x148] sm:$0xff] %v1885
        %1950 = vst [vmem:[%s524 + $0x150] sm:$0xff] %v1886
        %1951 = vst [vmem:[%s524 + $0x158] sm:$0xff] %v1887
        %1952 = vst [vmem:[%s524 + $0x160] sm:$0xff] %v1888
        %1953 = vst [vmem:[%s524 + $0x168] sm:$0xff] %v1889
        %1954 = vst [vmem:[%s524 + $0x170] sm:$0xff] %v1890
        %1955 = vst [vmem:[%s524 + $0x178] sm:$0xff] %v1891
        %1956 = vst [vmem:[%s524 + $0x180] sm:$0xff] %v1892
        %1957 = vst [vmem:[%s524 + $0x188] sm:$0xff] %v1893
        %1958 = vst [vmem:[%s524 + $0x190] sm:$0xff] %v1894
        %1959 = vst [vmem:[%s524 + $0x198] sm:$0xff] %v1895
        %1960 = vst [vmem:[%s524 + $0x1a0] sm:$0xff] %v1896
        %1961 = vst [vmem:[%s524 + $0x1a8] sm:$0xff] %v1897
        %1962 = vst [vmem:[%s524 + $0x1b0] sm:$0xff] %v1898
        %1963 = vst [vmem:[%s524 + $0x1b8] sm:$0xff] %v1899
        %1964 = vst [vmem:[%s524 + $0x1c0] sm:$0xff] %v1900
        %1965 = vst [vmem:[%s524 + $0x1c8] sm:$0xff] %v1901
        %1966 = vst [vmem:[%s524 + $0x1d0] sm:$0xff] %v1902
        %1967 = vst [vmem:[%s524 + $0x1d8] sm:$0xff] %v1903
        %1968 = vst [vmem:[%s524 + $0x1e0] sm:$0xff] %v1904
        %1969 = vst [vmem:[%s524 + $0x1e8] sm:$0xff] %v1905
        %1970 = vst [vmem:[%s524 + $0x1f0] sm:$0xff] %v1906
        %1971 = vst [vmem:[%s524 + $0x1f8] sm:$0xff] %v1907
        %s1972 = sand.u32 %s128, 1
        %s1973 = scalar_lea.sflag [#allocation4], %s1972
        %s1974 = sand.u32 %s128, 1
        %s1975 = smul.addr %s1974, 512
        %s1976 = scalar_lea.vmem [#allocation3], %s1975
        // Predicated region
        $region75: #{linear_pallas.1} parent=65 // pred_check
          %p1977 = pneg %p138
        $region76: #{linear_pallas.1} parent=65 // pred_check_branch
          %1979 = sbr.rel (%p1977) target = $region78
        $region77: #{linear_pallas.1} parent=65 // pred_region
          %s1980 = smul.u32 32, %s22
          %s1981 = smul.u32 2, %s23
          %s1983 = ssub.s32 8192, 8192
          %1984 = vsyncadd %s1973, %s1983
          %s1985 = smul.addr %s1980, 4
          %s1986 = sadd.s32 %s1981, %s1985
          %s1987 = smul.addr %s1986, 128
          %s1988 = scalar_lea.hbm %s3, %s1987
          %s1989 = sshll.u32 %s1976, 4
          %s1990 = int_to_ptr.vmem [resolvable:$true] %s1989
          %1995 = dma.vmem_to_hbm [thread:$0]  %s1990, 8192, %s1988, %s1973, 256, 512, 16
        $region78: #{linear_pallas.1} parent=65 // pred_fallthru
          _
      $region66: #{linear_pallas.1} parent=5 // pred_fallthru
        _
      %p1996 = scmp.le.s32.totalorder 2, %s12
      // Predicated region
      $region79: #{linear_pallas.1} parent=5 // pred_check
        %p1997 = pneg %p1996
      $region80: #{linear_pallas.1} parent=5 // pred_check_branch
        %1999 = sbr.rel (%p1997) target = $region82
      $region81: #{linear_pallas.1} parent=5 // pred_region
        %s2000 = ssub.s32 %s12, 2
        // Predicated region
        $region83: #{linear_pallas.1} parent=81 // pred_check
          %p2001 = pneg %p144
        $region84: #{linear_pallas.1} parent=81 // pred_check_branch
          %2003 = sbr.rel (%p2001) target = $region86
        $region85: #{linear_pallas.1} parent=81 // pred_region
          %s2004 = sand.u32 %s129, 1
          %s2005 = scalar_lea.sflag [#allocation4], %s2004
          %s2006 = sand.u32 %s129, 1
          %s2007 = smul.addr %s2006, 512
          %s2008 = scalar_lea.vmem [#allocation3], %s2007
          %2009 = dma.done %s2005, 8192
        $region86: #{linear_pallas.1} parent=81 // pred_fallthru
          _
      $region82: #{linear_pallas.1} parent=5 // pred_fallthru
        _
    $region6: #{linear_pallas.1} parent=1 // loop_footer
      %s16 = sadd.s32 1, %s12
    $region7: #{linear_pallas.1} parent=1 // loop_footer_branch
      %11 = sbr.rel target = $region3
    $region8: #{linear_pallas.1} parent=1 // loop_exit
      _
    %2010 = vsyncpa [#allocation4], 1
    %s2011 = scalar_lea.sflag [#allocation4], 1
    %2012 = vsyncpa %s2011, 1

</llo_original>
